<compile_context>
chip_gen: v5e
topology: v5e:2x2
jax: 0.10.0
libtpu: 0.0.40
codegen_flags: <defaults>
</compile_context>

<pallas_src>
import jax
import jax.numpy as jnp
from jax.experimental import pallas as pl
from jax.experimental.pallas import tpu as pltpu

EPS = 1e-5

# MXU operand dtype (accumulation / stats / BN / ReLU stay fp32).
_MXU_DTYPE = jnp.bfloat16

# Raised above the per-generation defaults (16 MiB v5e / 32 MiB v6e-v7x).
# Re-derive together with the band size when scaling to real UNet shapes.
VMEM_LIMIT_BYTES = 64 * 1024 * 1024


def _round_up(x, m):
    return (x + m - 1) // m * m


# ----------------------------------------------------------------------------
# conv 3x3 ('SAME') + bias + per-image channel statistics, channels-major
# ----------------------------------------------------------------------------
def _conv_body(a, w_ref, b_ref, y_ref, sum_ref, sq_ref, xpf_ref, col_ref,
               W, padl):
    """One image: 3x3 'SAME' conv + bias + per-image channel sum / sum-sq.

    a       : (Cin, H*W)      fp32, channels-major, row-flattened (pre-activated)
    w_ref   : (Cout, 9*Cin)   bf16, transposed packed HWIO weights
    b_ref   : (Cout, 1)       fp32 bias
    y_ref   : (Cout, H*W)     lane-dense output block
    sum_ref, sq_ref : (Cout, 1) per-image partial BatchNorm statistics
    xpf_ref : (Cin, H*W + 2*padl) fp32 scratch: flattened image + zero pads
    col_ref : (9*Cin, H*W)    fp32 scratch: im2col (tap-major, channel-minor)
    """
    Cin, HW = a.shape

    # In-kernel 'SAME' padding: zero `padl` columns left/right of the flattened
    # image.  padl is a multiple of 128 (>= W+1) so every store below is
    # lane-aligned.  Pads are re-zeroed each grid step on purpose: the batch
    # axis is "parallel", so iteration 0 is not guaranteed on every core.
    zpad = jnp.zeros((Cin, padl), jnp.float32)
    xpf_ref[:, 0:padl] = zpad
    xpf_ref[:, padl + HW:padl + HW + padl] = zpad
    xpf_ref[:, padl:padl + HW] = a

    # In-kernel left/right halo masks, hoisted out of the tap loop.
    lane = jax.lax.broadcasted_iota(jnp.int32, (Cin, HW), 1) % W
    keep_l = lane != 0          # zero wrap-around when the tap reaches dx = -1
    keep_r = lane != (W - 1)    # zero wrap-around when the tap reaches dx = +1

    # im2col pack: tap (dy, dx) is a single lane-shifted slice of the padded
    # flat image; row/column out-of-bounds lands in the zero pads, left/right
    # wrap-around is killed by the masks during the pack.
    for dy in range(3):
        for dx in range(3):
            t = dy * 3 + dx
            start = padl + (dy - 1) * W + (dx - 1)
            tap = xpf_ref[:, start:start + HW]
            if dx == 0:
                tap = jnp.where(keep_l, tap, 0.0)
            elif dx == 2:
                tap = jnp.where(keep_r, tap, 0.0)
            col_ref[t * Cin:(t + 1) * Cin, :] = tap

    # One MXU matmul per image: (Cout, 9*Cin) x (9*Cin, H*W), fp32 accumulate.
    acc = jnp.dot(w_ref[...], col_ref[...].astype(w_ref.dtype),
                  preferred_element_type=jnp.float32)
    acc = acc + b_ref[...]

    # Per-image partial BatchNorm statistics (fp32, from the fp32 accumulator).
    sum_ref[...] = jnp.sum(acc, axis=1, keepdims=True)
    sq_ref[...] = jnp.sum(acc * acc, axis=1, keepdims=True)

    # Lane-dense output store (last dim = H*W, multiple of 128).
    y_ref[...] = acc.astype(y_ref.dtype)


def _make_conv_kernel(W, padl, apply_pre):
    if apply_pre:
        def kernel(x_ref, scale_ref, shift_ref, w_ref, b_ref,
                   y_ref, sum_ref, sq_ref, xpf_ref, col_ref):
            # Previous layer's folded BatchNorm + ReLU fused into this load, so
            # the raw conv-1 output never makes an extra HBM round trip.
            a = jnp.maximum(
                x_ref[...].astype(jnp.float32) * scale_ref[...] + shift_ref[...],
                0.0)
            _conv_body(a, w_ref, b_ref, y_ref, sum_ref, sq_ref,
                       xpf_ref, col_ref, W, padl)
    else:
        def kernel(x_ref, w_ref, b_ref,
                   y_ref, sum_ref, sq_ref, xpf_ref, col_ref):
            _conv_body(x_ref[...].astype(jnp.float32), w_ref, b_ref,
                       y_ref, sum_ref, sq_ref, xpf_ref, col_ref, W, padl)
    return kernel


def conv3x3_stats(x_cm, w_t, b_col, H, W, out_dtype, pre=None):
    """3x3 'SAME' conv on every image (channels-major (N, C, H*W) layout),
    optional fused scale/shift/ReLU on the input, per-image channel stats."""
    N, Cin, HW = x_cm.shape
    assert HW == H * W
    Cout, K = w_t.shape
    assert K == 9 * Cin
    padl = _round_up(W + 1, 128)     # lane pad, multiple of 128 -> aligned stores

    kernel = _make_conv_kernel(W, padl, apply_pre=pre is not None)

    in_arrays = [x_cm]
    in_specs = [pl.BlockSpec((None, Cin, HW), lambda n: (n, 0, 0))]
    if pre is not None:
        in_arrays += [pre[0], pre[1]]                         # scale, shift
        in_specs += [pl.BlockSpec((Cin, 1), lambda n: (0, 0)),
                     pl.BlockSpec((Cin, 1), lambda n: (0, 0))]
    in_arrays += [w_t, b_col]
    in_specs += [pl.BlockSpec((Cout, 9 * Cin), lambda n: (0, 0)),
                 pl.BlockSpec((Cout, 1), lambda n: (0, 0))]

    return pl.pallas_call(
        kernel,
        out_shape=(jax.ShapeDtypeStruct((N, Cout, HW), out_dtype),
                   jax.ShapeDtypeStruct((N, Cout, 1), jnp.float32),
                   jax.ShapeDtypeStruct((N, Cout, 1), jnp.float32)),
        grid_spec=pltpu.PrefetchScalarGridSpec(
            num_scalar_prefetch=0,
            grid=(N,),
            in_specs=in_specs,
            out_specs=(pl.BlockSpec((None, Cout, HW), lambda n: (n, 0, 0)),
                       pl.BlockSpec((None, Cout, 1), lambda n: (n, 0, 0)),
                       pl.BlockSpec((None, Cout, 1), lambda n: (n, 0, 0))),
            scratch_shapes=[pltpu.VMEM((Cin, HW + 2 * padl), jnp.float32),
                            pltpu.VMEM((9 * Cin, HW), jnp.float32)]),
        compiler_params=pltpu.CompilerParams(
            # Per-image partial stats -> no cross-iteration accumulator, so the
            # batch axis is safely "parallel" (shardable over v7x's 2 TCs).
            dimension_semantics=("parallel",),
            vmem_limit_bytes=VMEM_LIMIT_BYTES),
    )(*in_arrays)


# ----------------------------------------------------------------------------
# glue: fold training-mode batch stats into per-channel scale/shift
# ----------------------------------------------------------------------------
def _fold_bn(sum_n, sq_n, gamma, beta, cnt):
    s = jnp.sum(sum_n, axis=0)                       # (C, 1)
    q = jnp.sum(sq_n, axis=0)
    mean = s / cnt
    # TODO(synk): at real UNet element counts switch to centered / Welford-style
    # partials; E[x^2] - E[x]^2 cancels catastrophically when |mean| >> std.
    var = jnp.maximum(q / cnt - mean * mean, 0.0)
    scale = gamma.reshape(-1, 1) / jnp.sqrt(var + EPS)   # biased var (training BN)
    shift = beta.reshape(-1, 1) - mean * scale
    return scale, shift                              # (C, 1) each, fp32


@jax.jit
def double_conv(x_nchw, params):
    w1, b1, g1, be1, w2, b2, g2, be2 = params
    N, Cin, H, W = x_nchw.shape
    Cmid, Cout = w1.shape[-1], w2.shape[-1]
    cnt = N * H * W

    # NCHW -> channels-major row-flattened (N, C, H*W): a FREE reshape (no
    # transpose), and the conv output comes back in the same layout, so the
    # NCHW boundary costs nothing.  MXU operands are bf16; everything else fp32.
    x_cm = x_nchw.reshape(N, Cin, H * W).astype(_MXU_DTYPE)
    w1t = w1.reshape(9 * Cin, Cmid).T.astype(_MXU_DTYPE)    # (Cmid, 9*Cin)
    w2t = w2.reshape(9 * Cmid, Cout).T.astype(_MXU_DTYPE)   # (Cout, 9*Cmid)

    # conv1: bf16-resident output + per-image channel stats from the fp32 acc.
    y1, s1, q1 = conv3x3_stats(x_cm, w1t, b1.reshape(-1, 1), H, W,
                               out_dtype=_MXU_DTYPE)
    sc1, sh1 = _fold_bn(s1, q1, g1, be1, cnt)

    # conv2 with conv1's folded BN + ReLU fused into its input load.
    y2, s2, q2 = conv3x3_stats(y1, w2t, b2.reshape(-1, 1), H, W,
                               out_dtype=jnp.float32, pre=(sc1, sh1))
    sc2, sh2 = _fold_bn(s2, q2, g2, be2, cnt)

    # Final BN + ReLU as plain jnp: XLA fuses it with the (free) reshape back to
    # NCHW, so y2 makes exactly one read + one write after conv2.
    o = jnp.maximum(y2 * sc2[None, :, :] + sh2[None, :, :], 0.0)
    return o.reshape(N, Cout, H, W)


# ----------------------------------------------------------------------------
# pure-JAX reference (matches PyTorch DoubleConv with training-mode BN, fp32)
# ----------------------------------------------------------------------------
def reference(x_nchw, params):
    w1, b1, g1, be1, w2, b2, g2, be2 = params
    x = jnp.transpose(x_nchw, (0, 2, 3, 1))

    def conv(x, w, b):
        y = jax.lax.conv_general_dilated(
            x, w, window_strides=(1, 1), padding='SAME',
            dimension_numbers=('NHWC', 'HWIO', 'NHWC'))
        return y + b.reshape(1, 1, 1, -1)

    def bnr(y, g, be):
        m = y.mean(axis=(0, 1, 2))
        v = y.var(axis=(0, 1, 2))
        return jnp.maximum(
            (y - m) / jnp.sqrt(v + EPS) * g.reshape(-1) + be.reshape(-1), 0.0)

    h = bnr(conv(x, w1, b1), g1, be1)
    h = bnr(conv(h, w2, b2), g2, be2)
    return jnp.transpose(h, (0, 3, 1, 2))


if __name__ == "__main__":
    N, Cin, H, W = 2, 4, 16, 16
    Cmid = Cout = 8              # DoubleConv(4, 8): mid_channels defaults to out

    key = jax.random.PRNGKey(0)
    ks = jax.random.split(key, 9)
    w1 = 0.2 * jax.random.normal(ks[0], (3, 3, Cin, Cmid), jnp.float32)
    b1 = 0.1 * jax.random.normal(ks[1], (Cmid,), jnp.float32)
    g1 = 1.0 + 0.1 * jax.random.normal(ks[2], (Cmid,), jnp.float32)
    be1 = 0.1 * jax.random.normal(ks[3], (Cmid,), jnp.float32)
    w2 = 0.2 * jax.random.normal(ks[4], (3, 3, Cmid, Cout), jnp.float32)
    b2 = 0.1 * jax.random.normal(ks[5], (Cout,), jnp.float32)
    g2 = 1.0 + 0.1 * jax.random.normal(ks[6], (Cout,), jnp.float32)
    be2 = 0.1 * jax.random.normal(ks[7], (Cout,), jnp.float32)
    x = jax.random.normal(ks[8], (N, Cin, H, W), jnp.float32)   # NCHW, as PyTorch

    params = (w1, b1, g1, be1, w2, b2, g2, be2)
    out = jax.block_until_ready(double_conv(x, params))
    ref = jax.block_until_ready(reference(x, params))

    assert out.shape == (N, Cout, H, W), out.shape
    err = float(jnp.max(jnp.abs(out - ref)))
    # bf16 MXU operands vs. the fp32 reference -> tolerance loosened accordingly
    # (accumulation, stats and the BN/ReLU epilogue stay fp32).
    assert jnp.allclose(out, ref, atol=3e-2, rtol=3e-2), f"max abs err {err}"
    print("KERNEL_OK")
</pallas_src>

<mosaic_0001>
module attributes {stable_mosaic.version = 11 : i64} {
  func.func @kernel(%arg0: i32, %arg1: memref<1x4x256xbf16, #tpu.memory_space<vmem>>, %arg2: memref<8x36xbf16, #tpu.memory_space<vmem>>, %arg3: memref<8x1xf32, #tpu.memory_space<vmem>>, %arg4: memref<1x8x256xbf16, #tpu.memory_space<vmem>>, %arg5: memref<1x8x1xf32, #tpu.memory_space<vmem>>, %arg6: memref<1x8x1xf32, #tpu.memory_space<vmem>>, %arg7: memref<4x512xf32, #tpu.memory_space<vmem>>, %arg8: memref<36x256xf32, #tpu.memory_space<vmem>>) attributes {dimension_semantics = [#tpu.dimension_semantics<parallel>], iteration_bounds = array<i64: 2>, scalar_prefetch = 0 : i64, scratch_operands = 2 : i64, tpu.core_type = #tpu.core_type<tc>, window_params = [{transform_indices = @transform_0, window_bounds = array<i64: 1, 4, 256>}, {pipeline_mode = #tpu.pipeline_mode<synchronous>, transform_indices = @transform_1, window_bounds = array<i64: 8, 36>}, {pipeline_mode = #tpu.pipeline_mode<synchronous>, transform_indices = @transform_2, window_bounds = array<i64: 8, 1>}, {transform_indices = @transform_3, window_bounds = array<i64: 1, 8, 256>}, {transform_indices = @transform_4, window_bounds = array<i64: 1, 8, 1>}, {transform_indices = @transform_5, window_bounds = array<i64: 1, 8, 1>}]} {
    %c0 = arith.constant 0 : index
    %c0_0 = arith.constant 0 : index
    %c0_1 = arith.constant 0 : index
    %0 = vector.load %arg1[%c0, %c0_0, %c0_1] : memref<1x4x256xbf16, #tpu.memory_space<vmem>>, vector<1x4x256xbf16>
    %1 = vector.shape_cast %0 : vector<1x4x256xbf16> to vector<4x256xbf16>
    %2 = arith.extf %1 : vector<4x256xbf16> to vector<4x256xf32>
    %cst = arith.constant 0.000000e+00 : f32
    %3 = vector.broadcast %cst : f32 to vector<4x128xf32>
    %c0_2 = arith.constant 0 : index
    %c0_3 = arith.constant 0 : index
    %4 = vector.load %arg7[%c0_2, %c0_3] : memref<4x512xf32, #tpu.memory_space<vmem>>, vector<4x128xf32>
    tpu.vector_store %arg7[%c0_2, %c0_3], %3 {strides = array<i32>} : memref<4x512xf32, #tpu.memory_space<vmem>>, vector<4x128xf32>,
    %c0_4 = arith.constant 0 : index
    %c384 = arith.constant 384 : index
    %5 = vector.load %arg7[%c0_4, %c384] : memref<4x512xf32, #tpu.memory_space<vmem>>, vector<4x128xf32>
    tpu.vector_store %arg7[%c0_4, %c384], %3 {strides = array<i32>} : memref<4x512xf32, #tpu.memory_space<vmem>>, vector<4x128xf32>,
    %c0_5 = arith.constant 0 : index
    %c128 = arith.constant 128 : index
    %6 = vector.load %arg7[%c0_5, %c128] : memref<4x512xf32, #tpu.memory_space<vmem>>, vector<4x256xf32>
    tpu.vector_store %arg7[%c0_5, %c128], %2 {strides = array<i32>} : memref<4x512xf32, #tpu.memory_space<vmem>>, vector<4x256xf32>,
    %7 = tpu.iota {dimensions = array<i32: 1>} : vector<4x256xi32>
    %c16_i32 = arith.constant 16 : i32
    %c0_i32 = arith.constant 0 : i32
    %8 = arith.cmpi eq, %c16_i32, %c0_i32 : i32
    %c1_i32 = arith.constant 1 : i32
    %9 = arith.select %8, %c1_i32, %c16_i32 : i32
    %10 = vector.broadcast %9 : i32 to vector<4x256xi32>
    %11 = arith.remsi %7, %10 : vector<4x256xi32>
    %c0_i32_6 = arith.constant 0 : i32
    %12 = vector.broadcast %c0_i32_6 : i32 to vector<4x256xi32>
    %13 = arith.cmpi ne, %11, %12 : vector<4x256xi32>
    %c0_i32_7 = arith.constant 0 : i32
    %14 = vector.broadcast %c0_i32_7 : i32 to vector<4x256xi32>
    %15 = arith.cmpi slt, %11, %14 : vector<4x256xi32>
    %c0_i32_8 = arith.constant 0 : i32
    %16 = arith.cmpi slt, %9, %c0_i32_8 : i32
    %17 = vector.broadcast %16 : i1 to vector<4x256xi1>
    %18 = vector.broadcast %17 : vector<4x256xi1> to vector<4x256xi1>
    %19 = arith.xori %15, %18 : vector<4x256xi1>
    %20 = arith.andi %19, %13 : vector<4x256xi1>
    %21 = vector.broadcast %9 : i32 to vector<4x256xi32>
    %22 = arith.addi %11, %21 : vector<4x256xi32>
    %23 = arith.select %20, %22, %11 : vector<4x256xi1>, vector<4x256xi32>
    %c0_i32_9 = arith.constant 0 : i32
    %24 = vector.broadcast %c0_i32_9 : i32 to vector<4x256xi32>
    %25 = arith.cmpi ne, %23, %24 : vector<4x256xi32>
    %c15_i32 = arith.constant 15 : i32
    %26 = vector.broadcast %c15_i32 : i32 to vector<4x256xi32>
    %27 = arith.cmpi ne, %23, %26 : vector<4x256xi32>
    %c0_10 = arith.constant 0 : index
    %c111 = arith.constant 111 : index
    %28 = vector.load %arg7[%c0_10, %c111] : memref<4x512xf32, #tpu.memory_space<vmem>>, vector<4x256xf32>
    %cst_11 = arith.constant 0.000000e+00 : f32
    %29 = vector.broadcast %cst_11 : f32 to vector<4x256xf32>
    %30 = arith.select %25, %28, %29 : vector<4x256xi1>, vector<4x256xf32>
    %c0_12 = arith.constant 0 : index
    %c0_13 = arith.constant 0 : index
    %31 = vector.load %arg8[%c0_12, %c0_13] : memref<36x256xf32, #tpu.memory_space<vmem>>, vector<4x256xf32>
    tpu.vector_store %arg8[%c0_12, %c0_13], %30 {strides = array<i32>} : memref<36x256xf32, #tpu.memory_space<vmem>>, vector<4x256xf32>,
    %c0_14 = arith.constant 0 : index
    %c112 = arith.constant 112 : index
    %32 = vector.load %arg7[%c0_14, %c112] : memref<4x512xf32, #tpu.memory_space<vmem>>, vector<4x256xf32>
    %c4 = arith.constant 4 : index
    %c0_15 = arith.constant 0 : index
    %33 = vector.load %arg8[%c4, %c0_15] : memref<36x256xf32, #tpu.memory_space<vmem>>, vector<4x256xf32>
    tpu.vector_store %arg8[%c4, %c0_15], %32 {strides = array<i32>} : memref<36x256xf32, #tpu.memory_space<vmem>>, vector<4x256xf32>,
    %c0_16 = arith.constant 0 : index
    %c113 = arith.constant 113 : index
    %34 = vector.load %arg7[%c0_16, %c113] : memref<4x512xf32, #tpu.memory_space<vmem>>, vector<4x256xf32>
    %cst_17 = arith.constant 0.000000e+00 : f32
    %35 = vector.broadcast %cst_17 : f32 to vector<4x256xf32>
    %36 = arith.select %27, %34, %35 : vector<4x256xi1>, vector<4x256xf32>
    %c8 = arith.constant 8 : index
    %c0_18 = arith.constant 0 : index
    %37 = vector.load %arg8[%c8, %c0_18] : memref<36x256xf32, #tpu.memory_space<vmem>>, vector<4x256xf32>
    tpu.vector_store %arg8[%c8, %c0_18], %36 {strides = array<i32>} : memref<36x256xf32, #tpu.memory_space<vmem>>, vector<4x256xf32>,
    %c0_19 = arith.constant 0 : index
    %c127 = arith.constant 127 : index
    %38 = vector.load %arg7[%c0_19, %c127] : memref<4x512xf32, #tpu.memory_space<vmem>>, vector<4x256xf32>
    %cst_20 = arith.constant 0.000000e+00 : f32
    %39 = vector.broadcast %cst_20 : f32 to vector<4x256xf32>
    %40 = arith.select %25, %38, %39 : vector<4x256xi1>, vector<4x256xf32>
    %c12 = arith.constant 12 : index
    %c0_21 = arith.constant 0 : index
    %41 = vector.load %arg8[%c12, %c0_21] : memref<36x256xf32, #tpu.memory_space<vmem>>, vector<4x256xf32>
    tpu.vector_store %arg8[%c12, %c0_21], %40 {strides = array<i32>} : memref<36x256xf32, #tpu.memory_space<vmem>>, vector<4x256xf32>,
    %c0_22 = arith.constant 0 : index
    %c128_23 = arith.constant 128 : index
    %42 = vector.load %arg7[%c0_22, %c128_23] : memref<4x512xf32, #tpu.memory_space<vmem>>, vector<4x256xf32>
    %c16 = arith.constant 16 : index
    %c0_24 = arith.constant 0 : index
    %43 = vector.load %arg8[%c16, %c0_24] : memref<36x256xf32, #tpu.memory_space<vmem>>, vector<4x256xf32>
    tpu.vector_store %arg8[%c16, %c0_24], %42 {strides = array<i32>} : memref<36x256xf32, #tpu.memory_space<vmem>>, vector<4x256xf32>,
    %c0_25 = arith.constant 0 : index
    %c129 = arith.constant 129 : index
    %44 = vector.load %arg7[%c0_25, %c129] : memref<4x512xf32, #tpu.memory_space<vmem>>, vector<4x256xf32>
    %cst_26 = arith.constant 0.000000e+00 : f32
    %45 = vector.broadcast %cst_26 : f32 to vector<4x256xf32>
    %46 = arith.select %27, %44, %45 : vector<4x256xi1>, vector<4x256xf32>
    %c20 = arith.constant 20 : index
    %c0_27 = arith.constant 0 : index
    %47 = vector.load %arg8[%c20, %c0_27] : memref<36x256xf32, #tpu.memory_space<vmem>>, vector<4x256xf32>
    tpu.vector_store %arg8[%c20, %c0_27], %46 {strides = array<i32>} : memref<36x256xf32, #tpu.memory_space<vmem>>, vector<4x256xf32>,
    %c0_28 = arith.constant 0 : index
    %c143 = arith.constant 143 : index
    %48 = vector.load %arg7[%c0_28, %c143] : memref<4x512xf32, #tpu.memory_space<vmem>>, vector<4x256xf32>
    %cst_29 = arith.constant 0.000000e+00 : f32
    %49 = vector.broadcast %cst_29 : f32 to vector<4x256xf32>
    %50 = arith.select %25, %48, %49 : vector<4x256xi1>, vector<4x256xf32>
    %c24 = arith.constant 24 : index
    %c0_30 = arith.constant 0 : index
    %51 = vector.load %arg8[%c24, %c0_30] : memref<36x256xf32, #tpu.memory_space<vmem>>, vector<4x256xf32>
    tpu.vector_store %arg8[%c24, %c0_30], %50 {strides = array<i32>} : memref<36x256xf32, #tpu.memory_space<vmem>>, vector<4x256xf32>,
    %c0_31 = arith.constant 0 : index
    %c144 = arith.constant 144 : index
    %52 = vector.load %arg7[%c0_31, %c144] : memref<4x512xf32, #tpu.memory_space<vmem>>, vector<4x256xf32>
    %c28 = arith.constant 28 : index
    %c0_32 = arith.constant 0 : index
    %53 = vector.load %arg8[%c28, %c0_32] : memref<36x256xf32, #tpu.memory_space<vmem>>, vector<4x256xf32>
    tpu.vector_store %arg8[%c28, %c0_32], %52 {strides = array<i32>} : memref<36x256xf32, #tpu.memory_space<vmem>>, vector<4x256xf32>,
    %c0_33 = arith.constant 0 : index
    %c145 = arith.constant 145 : index
    %54 = vector.load %arg7[%c0_33, %c145] : memref<4x512xf32, #tpu.memory_space<vmem>>, vector<4x256xf32>
    %cst_34 = arith.constant 0.000000e+00 : f32
    %55 = vector.broadcast %cst_34 : f32 to vector<4x256xf32>
    %56 = arith.select %27, %54, %55 : vector<4x256xi1>, vector<4x256xf32>
    %c32 = arith.constant 32 : index
    %c0_35 = arith.constant 0 : index
    %57 = vector.load %arg8[%c32, %c0_35] : memref<36x256xf32, #tpu.memory_space<vmem>>, vector<4x256xf32>
    tpu.vector_store %arg8[%c32, %c0_35], %56 {strides = array<i32>} : memref<36x256xf32, #tpu.memory_space<vmem>>, vector<4x256xf32>,
    %c0_36 = arith.constant 0 : index
    %c0_37 = arith.constant 0 : index
    %58 = vector.load %arg2[%c0_36, %c0_37] : memref<8x36xbf16, #tpu.memory_space<vmem>>, vector<8x36xbf16>
    %c0_38 = arith.constant 0 : index
    %c0_39 = arith.constant 0 : index
    %59 = vector.load %arg8[%c0_38, %c0_39] : memref<36x256xf32, #tpu.memory_space<vmem>>, vector<36x256xf32>
    %60 = arith.truncf %59 : vector<36x256xf32> to vector<36x256xbf16>
    %cst_40 = arith.constant dense<0.000000e+00> : vector<8x256xf32>
    %61 = tpu.matmul %58, %60, %cst_40 {dimension_numbers = #tpu.dot_dimension_numbers<[1], [0], [0], [1], [0, 0, 1, 1], [], []>} : vector<8x36xbf16>, vector<36x256xbf16>, vector<8x256xf32> -> vector<8x256xf32>
    %c0_41 = arith.constant 0 : index
    %c0_42 = arith.constant 0 : index
    %62 = vector.load %arg3[%c0_41, %c0_42] : memref<8x1xf32, #tpu.memory_space<vmem>>, vector<8x1xf32>
    %63 = vector.broadcast %62 : vector<8x1xf32> to vector<8x256xf32>
    %64 = arith.addf %61, %63 : vector<8x256xf32>
    %cst_43 = arith.constant dense<0.000000e+00> : vector<8xf32>
    %65 = vector.multi_reduction <add>, %64, %cst_43 [1] : vector<8x256xf32> to vector<8xf32>
    %66 = vector.shape_cast %65 : vector<8xf32> to vector<8x1xf32>
    %c0_44 = arith.constant 0 : index
    %c0_45 = arith.constant 0 : index
    %c0_46 = arith.constant 0 : index
    %67 = vector.load %arg5[%c0_44, %c0_45, %c0_46] : memref<1x8x1xf32, #tpu.memory_space<vmem>>, vector<1x8x1xf32>
    %68 = vector.shape_cast %67 : vector<1x8x1xf32> to vector<8x1xf32>
    %69 = vector.shape_cast %66 : vector<8x1xf32> to vector<1x8x1xf32>
    tpu.vector_store %arg5[%c0_44, %c0_45, %c0_46], %69 {strides = array<i32>} : memref<1x8x1xf32, #tpu.memory_space<vmem>>, vector<1x8x1xf32>,
    %70 = arith.mulf %64, %64 : vector<8x256xf32>
    %cst_47 = arith.constant dense<0.000000e+00> : vector<8xf32>
    %71 = vector.multi_reduction <add>, %70, %cst_47 [1] : vector<8x256xf32> to vector<8xf32>
    %72 = vector.shape_cast %71 : vector<8xf32> to vector<8x1xf32>
    %c0_48 = arith.constant 0 : index
    %c0_49 = arith.constant 0 : index
    %c0_50 = arith.constant 0 : index
    %73 = vector.load %arg6[%c0_48, %c0_49, %c0_50] : memref<1x8x1xf32, #tpu.memory_space<vmem>>, vector<1x8x1xf32>
    %74 = vector.shape_cast %73 : vector<1x8x1xf32> to vector<8x1xf32>
    %75 = vector.shape_cast %72 : vector<8x1xf32> to vector<1x8x1xf32>
    tpu.vector_store %arg6[%c0_48, %c0_49, %c0_50], %75 {strides = array<i32>} : memref<1x8x1xf32, #tpu.memory_space<vmem>>, vector<1x8x1xf32>,
    %76 = arith.truncf %64 : vector<8x256xf32> to vector<8x256xbf16>
    %c0_51 = arith.constant 0 : index
    %c0_52 = arith.constant 0 : index
    %c0_53 = arith.constant 0 : index
    %77 = vector.load %arg4[%c0_51, %c0_52, %c0_53] : memref<1x8x256xbf16, #tpu.memory_space<vmem>>, vector<1x8x256xbf16>
    %78 = vector.shape_cast %77 : vector<1x8x256xbf16> to vector<8x256xbf16>
    %79 = vector.shape_cast %76 : vector<8x256xbf16> to vector<1x8x256xbf16>
    tpu.vector_store %arg4[%c0_51, %c0_52, %c0_53], %79 {strides = array<i32>} : memref<1x8x256xbf16, #tpu.memory_space<vmem>>, vector<1x8x256xbf16>,
    return
  }
  func.func @transform_0(%arg0: i32) -> (i32, i32, i32) {
    %c0_i32 = arith.constant 0 : i32
    %c0_i32_0 = arith.constant 0 : i32
    %c0_i32_1 = arith.constant 0 : i32
    return %arg0, %c0_i32, %c0_i32_0 : i32, i32, i32
  }
  func.func @transform_1(%arg0: i32) -> (i32, i32) {
    %c0_i32 = arith.constant 0 : i32
    %c0_i32_0 = arith.constant 0 : i32
    %c0_i32_1 = arith.constant 0 : i32
    return %c0_i32, %c0_i32_0 : i32, i32
  }
  func.func @transform_2(%arg0: i32) -> (i32, i32) {
    %c0_i32 = arith.constant 0 : i32
    %c0_i32_0 = arith.constant 0 : i32
    %c0_i32_1 = arith.constant 0 : i32
    return %c0_i32, %c0_i32_0 : i32, i32
  }
  func.func @transform_3(%arg0: i32) -> (i32, i32, i32) {
    %c0_i32 = arith.constant 0 : i32
    %c0_i32_0 = arith.constant 0 : i32
    %c0_i32_1 = arith.constant 0 : i32
    return %arg0, %c0_i32, %c0_i32_0 : i32, i32, i32
  }
  func.func @transform_4(%arg0: i32) -> (i32, i32, i32) {
    %c0_i32 = arith.constant 0 : i32
    %c0_i32_0 = arith.constant 0 : i32
    %c0_i32_1 = arith.constant 0 : i32
    return %arg0, %c0_i32, %c0_i32_0 : i32, i32, i32
  }
  func.func @transform_5(%arg0: i32) -> (i32, i32, i32) {
    %c0_i32 = arith.constant 0 : i32
    %c0_i32_0 = arith.constant 0 : i32
    %c0_i32_1 = arith.constant 0 : i32
    return %arg0, %c0_i32, %c0_i32_0 : i32, i32, i32
  }
}

module attributes {stable_mosaic.version = 11 : i64} {
  func.func @kernel(%arg0: i32, %arg1: memref<1x8x256xbf16, #tpu.memory_space<vmem>>, %arg2: memref<8x1xf32, #tpu.memory_space<vmem>>, %arg3: memref<8x1xf32, #tpu.memory_space<vmem>>, %arg4: memref<8x72xbf16, #tpu.memory_space<vmem>>, %arg5: memref<8x1xf32, #tpu.memory_space<vmem>>, %arg6: memref<1x8x256xf32, #tpu.memory_space<vmem>>, %arg7: memref<1x8x1xf32, #tpu.memory_space<vmem>>, %arg8: memref<1x8x1xf32, #tpu.memory_space<vmem>>, %arg9: memref<8x512xf32, #tpu.memory_space<vmem>>, %arg10: memref<72x256xf32, #tpu.memory_space<vmem>>) attributes {dimension_semantics = [#tpu.dimension_semantics<parallel>], iteration_bounds = array<i64: 2>, scalar_prefetch = 0 : i64, scratch_operands = 2 : i64, tpu.core_type = #tpu.core_type<tc>, window_params = [{transform_indices = @transform_0, window_bounds = array<i64: 1, 8, 256>}, {pipeline_mode = #tpu.pipeline_mode<synchronous>, transform_indices = @transform_1, window_bounds = array<i64: 8, 1>}, {pipeline_mode = #tpu.pipeline_mode<synchronous>, transform_indices = @transform_2, window_bounds = array<i64: 8, 1>}, {pipeline_mode = #tpu.pipeline_mode<synchronous>, transform_indices = @transform_3, window_bounds = array<i64: 8, 72>}, {pipeline_mode = #tpu.pipeline_mode<synchronous>, transform_indices = @transform_4, window_bounds = array<i64: 8, 1>}, {transform_indices = @transform_5, window_bounds = array<i64: 1, 8, 256>}, {transform_indices = @transform_6, window_bounds = array<i64: 1, 8, 1>}, {transform_indices = @transform_7, window_bounds = array<i64: 1, 8, 1>}]} {
    %c0 = arith.constant 0 : index
    %c0_0 = arith.constant 0 : index
    %c0_1 = arith.constant 0 : index
    %0 = vector.load %arg1[%c0, %c0_0, %c0_1] : memref<1x8x256xbf16, #tpu.memory_space<vmem>>, vector<1x8x256xbf16>
    %1 = vector.shape_cast %0 : vector<1x8x256xbf16> to vector<8x256xbf16>
    %2 = arith.extf %1 : vector<8x256xbf16> to vector<8x256xf32>
    %c0_2 = arith.constant 0 : index
    %c0_3 = arith.constant 0 : index
    %3 = vector.load %arg2[%c0_2, %c0_3] : memref<8x1xf32, #tpu.memory_space<vmem>>, vector<8x1xf32>
    %4 = vector.broadcast %3 : vector<8x1xf32> to vector<8x256xf32>
    %5 = arith.mulf %2, %4 : vector<8x256xf32>
    %c0_4 = arith.constant 0 : index
    %c0_5 = arith.constant 0 : index
    %6 = vector.load %arg3[%c0_4, %c0_5] : memref<8x1xf32, #tpu.memory_space<vmem>>, vector<8x1xf32>
    %7 = vector.broadcast %6 : vector<8x1xf32> to vector<8x256xf32>
    %8 = arith.addf %5, %7 : vector<8x256xf32>
    %cst = arith.constant 0.000000e+00 : f32
    %9 = vector.broadcast %cst : f32 to vector<8x256xf32>
    %10 = arith.maximumf %8, %9 : vector<8x256xf32>
    %cst_6 = arith.constant 0.000000e+00 : f32
    %11 = vector.broadcast %cst_6 : f32 to vector<8x128xf32>
    %c0_7 = arith.constant 0 : index
    %c0_8 = arith.constant 0 : index
    %12 = vector.load %arg9[%c0_7, %c0_8] : memref<8x512xf32, #tpu.memory_space<vmem>>, vector<8x128xf32>
    tpu.vector_store %arg9[%c0_7, %c0_8], %11 {strides = array<i32>} : memref<8x512xf32, #tpu.memory_space<vmem>>, vector<8x128xf32>,
    %c0_9 = arith.constant 0 : index
    %c384 = arith.constant 384 : index
    %13 = vector.load %arg9[%c0_9, %c384] : memref<8x512xf32, #tpu.memory_space<vmem>>, vector<8x128xf32>
    tpu.vector_store %arg9[%c0_9, %c384], %11 {strides = array<i32>} : memref<8x512xf32, #tpu.memory_space<vmem>>, vector<8x128xf32>,
    %c0_10 = arith.constant 0 : index
    %c128 = arith.constant 128 : index
    %14 = vector.load %arg9[%c0_10, %c128] : memref<8x512xf32, #tpu.memory_space<vmem>>, vector<8x256xf32>
    tpu.vector_store %arg9[%c0_10, %c128], %10 {strides = array<i32>} : memref<8x512xf32, #tpu.memory_space<vmem>>, vector<8x256xf32>,
    %15 = tpu.iota {dimensions = array<i32: 1>} : vector<8x256xi32>
    %c16_i32 = arith.constant 16 : i32
    %c0_i32 = arith.constant 0 : i32
    %16 = arith.cmpi eq, %c16_i32, %c0_i32 : i32
    %c1_i32 = arith.constant 1 : i32
    %17 = arith.select %16, %c1_i32, %c16_i32 : i32
    %18 = vector.broadcast %17 : i32 to vector<8x256xi32>
    %19 = arith.remsi %15, %18 : vector<8x256xi32>
    %c0_i32_11 = arith.constant 0 : i32
    %20 = vector.broadcast %c0_i32_11 : i32 to vector<8x256xi32>
    %21 = arith.cmpi ne, %19, %20 : vector<8x256xi32>
    %c0_i32_12 = arith.constant 0 : i32
    %22 = vector.broadcast %c0_i32_12 : i32 to vector<8x256xi32>
    %23 = arith.cmpi slt, %19, %22 : vector<8x256xi32>
    %c0_i32_13 = arith.constant 0 : i32
    %24 = arith.cmpi slt, %17, %c0_i32_13 : i32
    %25 = vector.broadcast %24 : i1 to vector<8x256xi1>
    %26 = vector.broadcast %25 : vector<8x256xi1> to vector<8x256xi1>
    %27 = arith.xori %23, %26 : vector<8x256xi1>
    %28 = arith.andi %27, %21 : vector<8x256xi1>
    %29 = vector.broadcast %17 : i32 to vector<8x256xi32>
    %30 = arith.addi %19, %29 : vector<8x256xi32>
    %31 = arith.select %28, %30, %19 : vector<8x256xi1>, vector<8x256xi32>
    %c0_i32_14 = arith.constant 0 : i32
    %32 = vector.broadcast %c0_i32_14 : i32 to vector<8x256xi32>
    %33 = arith.cmpi ne, %31, %32 : vector<8x256xi32>
    %c15_i32 = arith.constant 15 : i32
    %34 = vector.broadcast %c15_i32 : i32 to vector<8x256xi32>
    %35 = arith.cmpi ne, %31, %34 : vector<8x256xi32>
    %c0_15 = arith.constant 0 : index
    %c111 = arith.constant 111 : index
    %36 = vector.load %arg9[%c0_15, %c111] : memref<8x512xf32, #tpu.memory_space<vmem>>, vector<8x256xf32>
    %cst_16 = arith.constant 0.000000e+00 : f32
    %37 = vector.broadcast %cst_16 : f32 to vector<8x256xf32>
    %38 = arith.select %33, %36, %37 : vector<8x256xi1>, vector<8x256xf32>
    %c0_17 = arith.constant 0 : index
    %c0_18 = arith.constant 0 : index
    %39 = vector.load %arg10[%c0_17, %c0_18] : memref<72x256xf32, #tpu.memory_space<vmem>>, vector<8x256xf32>
    tpu.vector_store %arg10[%c0_17, %c0_18], %38 {strides = array<i32>} : memref<72x256xf32, #tpu.memory_space<vmem>>, vector<8x256xf32>,
    %c0_19 = arith.constant 0 : index
    %c112 = arith.constant 112 : index
    %40 = vector.load %arg9[%c0_19, %c112] : memref<8x512xf32, #tpu.memory_space<vmem>>, vector<8x256xf32>
    %c8 = arith.constant 8 : index
    %c0_20 = arith.constant 0 : index
    %41 = vector.load %arg10[%c8, %c0_20] : memref<72x256xf32, #tpu.memory_space<vmem>>, vector<8x256xf32>
    tpu.vector_store %arg10[%c8, %c0_20], %40 {strides = array<i32>} : memref<72x256xf32, #tpu.memory_space<vmem>>, vector<8x256xf32>,
    %c0_21 = arith.constant 0 : index
    %c113 = arith.constant 113 : index
    %42 = vector.load %arg9[%c0_21, %c113] : memref<8x512xf32, #tpu.memory_space<vmem>>, vector<8x256xf32>
    %cst_22 = arith.constant 0.000000e+00 : f32
    %43 = vector.broadcast %cst_22 : f32 to vector<8x256xf32>
    %44 = arith.select %35, %42, %43 : vector<8x256xi1>, vector<8x256xf32>
    %c16 = arith.constant 16 : index
    %c0_23 = arith.constant 0 : index
    %45 = vector.load %arg10[%c16, %c0_23] : memref<72x256xf32, #tpu.memory_space<vmem>>, vector<8x256xf32>
    tpu.vector_store %arg10[%c16, %c0_23], %44 {strides = array<i32>} : memref<72x256xf32, #tpu.memory_space<vmem>>, vector<8x256xf32>,
    %c0_24 = arith.constant 0 : index
    %c127 = arith.constant 127 : index
    %46 = vector.load %arg9[%c0_24, %c127] : memref<8x512xf32, #tpu.memory_space<vmem>>, vector<8x256xf32>
    %cst_25 = arith.constant 0.000000e+00 : f32
    %47 = vector.broadcast %cst_25 : f32 to vector<8x256xf32>
    %48 = arith.select %33, %46, %47 : vector<8x256xi1>, vector<8x256xf32>
    %c24 = arith.constant 24 : index
    %c0_26 = arith.constant 0 : index
    %49 = vector.load %arg10[%c24, %c0_26] : memref<72x256xf32, #tpu.memory_space<vmem>>, vector<8x256xf32>
    tpu.vector_store %arg10[%c24, %c0_26], %48 {strides = array<i32>} : memref<72x256xf32, #tpu.memory_space<vmem>>, vector<8x256xf32>,
    %c0_27 = arith.constant 0 : index
    %c128_28 = arith.constant 128 : index
    %50 = vector.load %arg9[%c0_27, %c128_28] : memref<8x512xf32, #tpu.memory_space<vmem>>, vector<8x256xf32>
    %c32 = arith.constant 32 : index
    %c0_29 = arith.constant 0 : index
    %51 = vector.load %arg10[%c32, %c0_29] : memref<72x256xf32, #tpu.memory_space<vmem>>, vector<8x256xf32>
    tpu.vector_store %arg10[%c32, %c0_29], %50 {strides = array<i32>} : memref<72x256xf32, #tpu.memory_space<vmem>>, vector<8x256xf32>,
    %c0_30 = arith.constant 0 : index
    %c129 = arith.constant 129 : index
    %52 = vector.load %arg9[%c0_30, %c129] : memref<8x512xf32, #tpu.memory_space<vmem>>, vector<8x256xf32>
    %cst_31 = arith.constant 0.000000e+00 : f32
    %53 = vector.broadcast %cst_31 : f32 to vector<8x256xf32>
    %54 = arith.select %35, %52, %53 : vector<8x256xi1>, vector<8x256xf32>
    %c40 = arith.constant 40 : index
    %c0_32 = arith.constant 0 : index
    %55 = vector.load %arg10[%c40, %c0_32] : memref<72x256xf32, #tpu.memory_space<vmem>>, vector<8x256xf32>
    tpu.vector_store %arg10[%c40, %c0_32], %54 {strides = array<i32>} : memref<72x256xf32, #tpu.memory_space<vmem>>, vector<8x256xf32>,
    %c0_33 = arith.constant 0 : index
    %c143 = arith.constant 143 : index
    %56 = vector.load %arg9[%c0_33, %c143] : memref<8x512xf32, #tpu.memory_space<vmem>>, vector<8x256xf32>
    %cst_34 = arith.constant 0.000000e+00 : f32
    %57 = vector.broadcast %cst_34 : f32 to vector<8x256xf32>
    %58 = arith.select %33, %56, %57 : vector<8x256xi1>, vector<8x256xf32>
    %c48 = arith.constant 48 : index
    %c0_35 = arith.constant 0 : index
    %59 = vector.load %arg10[%c48, %c0_35] : memref<72x256xf32, #tpu.memory_space<vmem>>, vector<8x256xf32>
    tpu.vector_store %arg10[%c48, %c0_35], %58 {strides = array<i32>} : memref<72x256xf32, #tpu.memory_space<vmem>>, vector<8x256xf32>,
    %c0_36 = arith.constant 0 : index
    %c144 = arith.constant 144 : index
    %60 = vector.load %arg9[%c0_36, %c144] : memref<8x512xf32, #tpu.memory_space<vmem>>, vector<8x256xf32>
    %c56 = arith.constant 56 : index
    %c0_37 = arith.constant 0 : index
    %61 = vector.load %arg10[%c56, %c0_37] : memref<72x256xf32, #tpu.memory_space<vmem>>, vector<8x256xf32>
    tpu.vector_store %arg10[%c56, %c0_37], %60 {strides = array<i32>} : memref<72x256xf32, #tpu.memory_space<vmem>>, vector<8x256xf32>,
    %c0_38 = arith.constant 0 : index
    %c145 = arith.constant 145 : index
    %62 = vector.load %arg9[%c0_38, %c145] : memref<8x512xf32, #tpu.memory_space<vmem>>, vector<8x256xf32>
    %cst_39 = arith.constant 0.000000e+00 : f32
    %63 = vector.broadcast %cst_39 : f32 to vector<8x256xf32>
    %64 = arith.select %35, %62, %63 : vector<8x256xi1>, vector<8x256xf32>
    %c64 = arith.constant 64 : index
    %c0_40 = arith.constant 0 : index
    %65 = vector.load %arg10[%c64, %c0_40] : memref<72x256xf32, #tpu.memory_space<vmem>>, vector<8x256xf32>
    tpu.vector_store %arg10[%c64, %c0_40], %64 {strides = array<i32>} : memref<72x256xf32, #tpu.memory_space<vmem>>, vector<8x256xf32>,
    %c0_41 = arith.constant 0 : index
    %c0_42 = arith.constant 0 : index
    %66 = vector.load %arg4[%c0_41, %c0_42] : memref<8x72xbf16, #tpu.memory_space<vmem>>, vector<8x72xbf16>
    %c0_43 = arith.constant 0 : index
    %c0_44 = arith.constant 0 : index
    %67 = vector.load %arg10[%c0_43, %c0_44] : memref<72x256xf32, #tpu.memory_space<vmem>>, vector<72x256xf32>
    %68 = arith.truncf %67 : vector<72x256xf32> to vector<72x256xbf16>
    %cst_45 = arith.constant dense<0.000000e+00> : vector<8x256xf32>
    %69 = tpu.matmul %66, %68, %cst_45 {dimension_numbers = #tpu.dot_dimension_numbers<[1], [0], [0], [1], [0, 0, 1, 1], [], []>} : vector<8x72xbf16>, vector<72x256xbf16>, vector<8x256xf32> -> vector<8x256xf32>
    %c0_46 = arith.constant 0 : index
    %c0_47 = arith.constant 0 : index
    %70 = vector.load %arg5[%c0_46, %c0_47] : memref<8x1xf32, #tpu.memory_space<vmem>>, vector<8x1xf32>
    %71 = vector.broadcast %70 : vector<8x1xf32> to vector<8x256xf32>
    %72 = arith.addf %69, %71 : vector<8x256xf32>
    %cst_48 = arith.constant dense<0.000000e+00> : vector<8xf32>
    %73 = vector.multi_reduction <add>, %72, %cst_48 [1] : vector<8x256xf32> to vector<8xf32>
    %74 = vector.shape_cast %73 : vector<8xf32> to vector<8x1xf32>
    %c0_49 = arith.constant 0 : index
    %c0_50 = arith.constant 0 : index
    %c0_51 = arith.constant 0 : index
    %75 = vector.load %arg7[%c0_49, %c0_50, %c0_51] : memref<1x8x1xf32, #tpu.memory_space<vmem>>, vector<1x8x1xf32>
    %76 = vector.shape_cast %75 : vector<1x8x1xf32> to vector<8x1xf32>
    %77 = vector.shape_cast %74 : vector<8x1xf32> to vector<1x8x1xf32>
    tpu.vector_store %arg7[%c0_49, %c0_50, %c0_51], %77 {strides = array<i32>} : memref<1x8x1xf32, #tpu.memory_space<vmem>>, vector<1x8x1xf32>,
    %78 = arith.mulf %72, %72 : vector<8x256xf32>
    %cst_52 = arith.constant dense<0.000000e+00> : vector<8xf32>
    %79 = vector.multi_reduction <add>, %78, %cst_52 [1] : vector<8x256xf32> to vector<8xf32>
    %80 = vector.shape_cast %79 : vector<8xf32> to vector<8x1xf32>
    %c0_53 = arith.constant 0 : index
    %c0_54 = arith.constant 0 : index
    %c0_55 = arith.constant 0 : index
    %81 = vector.load %arg8[%c0_53, %c0_54, %c0_55] : memref<1x8x1xf32, #tpu.memory_space<vmem>>, vector<1x8x1xf32>
    %82 = vector.shape_cast %81 : vector<1x8x1xf32> to vector<8x1xf32>
    %83 = vector.shape_cast %80 : vector<8x1xf32> to vector<1x8x1xf32>
    tpu.vector_store %arg8[%c0_53, %c0_54, %c0_55], %83 {strides = array<i32>} : memref<1x8x1xf32, #tpu.memory_space<vmem>>, vector<1x8x1xf32>,
    %c0_56 = arith.constant 0 : index
    %c0_57 = arith.constant 0 : index
    %c0_58 = arith.constant 0 : index
    %84 = vector.load %arg6[%c0_56, %c0_57, %c0_58] : memref<1x8x256xf32, #tpu.memory_space<vmem>>, vector<1x8x256xf32>
    %85 = vector.shape_cast %84 : vector<1x8x256xf32> to vector<8x256xf32>
    %86 = vector.shape_cast %72 : vector<8x256xf32> to vector<1x8x256xf32>
    tpu.vector_store %arg6[%c0_56, %c0_57, %c0_58], %86 {strides = array<i32>} : memref<1x8x256xf32, #tpu.memory_space<vmem>>, vector<1x8x256xf32>,
    return
  }
  func.func @transform_0(%arg0: i32) -> (i32, i32, i32) {
    %c0_i32 = arith.constant 0 : i32
    %c0_i32_0 = arith.constant 0 : i32
    %c0_i32_1 = arith.constant 0 : i32
    return %arg0, %c0_i32, %c0_i32_0 : i32, i32, i32
  }
  func.func @transform_1(%arg0: i32) -> (i32, i32) {
    %c0_i32 = arith.constant 0 : i32
    %c0_i32_0 = arith.constant 0 : i32
    %c0_i32_1 = arith.constant 0 : i32
    return %c0_i32, %c0_i32_0 : i32, i32
  }
  func.func @transform_2(%arg0: i32) -> (i32, i32) {
    %c0_i32 = arith.constant 0 : i32
    %c0_i32_0 = arith.constant 0 : i32
    %c0_i32_1 = arith.constant 0 : i32
    return %c0_i32, %c0_i32_0 : i32, i32
  }
  func.func @transform_3(%arg0: i32) -> (i32, i32) {
    %c0_i32 = arith.constant 0 : i32
    %c0_i32_0 = arith.constant 0 : i32
    %c0_i32_1 = arith.constant 0 : i32
    return %c0_i32, %c0_i32_0 : i32, i32
  }
  func.func @transform_4(%arg0: i32) -> (i32, i32) {
    %c0_i32 = arith.constant 0 : i32
    %c0_i32_0 = arith.constant 0 : i32
    %c0_i32_1 = arith.constant 0 : i32
    return %c0_i32, %c0_i32_0 : i32, i32
  }
  func.func @transform_5(%arg0: i32) -> (i32, i32, i32) {
    %c0_i32 = arith.constant 0 : i32
    %c0_i32_0 = arith.constant 0 : i32
    %c0_i32_1 = arith.constant 0 : i32
    return %arg0, %c0_i32, %c0_i32_0 : i32, i32, i32
  }
  func.func @transform_6(%arg0: i32) -> (i32, i32, i32) {
    %c0_i32 = arith.constant 0 : i32
    %c0_i32_0 = arith.constant 0 : i32
    %c0_i32_1 = arith.constant 0 : i32
    return %arg0, %c0_i32, %c0_i32_0 : i32, i32, i32
  }
  func.func @transform_7(%arg0: i32) -> (i32, i32, i32) {
    %c0_i32 = arith.constant 0 : i32
    %c0_i32_0 = arith.constant 0 : i32
    %c0_i32_1 = arith.constant 0 : i32
    return %arg0, %c0_i32, %c0_i32_0 : i32, i32, i32
  }
}

</mosaic_0001>

<llo_original>
// kernel: double_conv.3
$region0: #{double_conv.3}
  #allocation0 [shape = 'u32[]', space=smem, size = 0x4, offset = 0x4, fixed_abs, tag = 'smem constant byte address 0x4 - core index']
  #allocation1 [shape = 'u32[72,128]{1,0:T(1,128)}', space=vmem, size = 0x9000, scoped, tag = 'internal scratch']
  #allocation2 [shape = 'f32[8,512]{1,0:T(8,128)}', space=vmem, size = 0x4000, scoped, tag = 'scratch operand']
  #allocation3 [shape = 'f32[72,256]{1,0:T(8,128)}', space=vmem, size = 0x12000, scoped, tag = 'scratch operand']
  %s0 = inlined_call_operand.vmem [shape: bf16[2,8,256], index: 0, kind: input, shape index: {}]
  %s1 = inlined_call_operand.vmem [shape: f32[8,1], index: 1, kind: input, shape index: {}]
  %s2 = inlined_call_operand.vmem [shape: f32[8,1], index: 2, kind: input, shape index: {}]
  %s3 = inlined_call_operand.vmem [shape: bf16[8,72], index: 3, kind: input, shape index: {}]
  %s4 = inlined_call_operand.vmem [shape: f32[8,1], index: 4, kind: input, shape index: {}]
  %s5 = inlined_call_operand.vmem [shape: f32[2,8,256], index: 5, kind: output, shape index: {0}]
  %s6 = inlined_call_operand.vmem [shape: f32[2,8,1], index: 6, kind: output, shape index: {1}]
  %s7 = inlined_call_operand.vmem [shape: f32[2,8,1], index: 7, kind: output, shape index: {2}]
  %8 = xla_tuple %s5, %s6, %s7
  %s9 = sld [smem:[#allocation0]]
  $region69: #{double_conv.3} parent=0
    _
  %s11 = ssub.s32 1, %s9
  %s12 = scalar_select 0, %s11, %s9
  loop: start=0, step=1, limit=4
  $region2: #{double_conv.3} parent=0 // loop_pre_header
    _
  $region3: #{double_conv.3} parent=0 // loop_header
    %s14 = sphi 0, %s18
    %p15 = scmp.ge.s32.totalorder %s14, 4
    %s24 = sphi 0, %s26
    %s27 = sphi 0, %s24
    %s28 = sphi 0, %s27
    %s44 = sphi 0, %s28
    %s48 = sphi 0, %s48
    %s50 = sphi 0, %s48
    %s51 = sphi 0, %s50
    %s65 = sphi 0, %s51
    %s69 = sphi 0, %s69
    %s71 = sphi 0, %s69
    %s72 = sphi 0, %s71
    %s86 = sphi 0, %s72
    %s90 = sphi 0, %s90
    %s92 = sphi 0, %s90
    %s93 = sphi 0, %s92
    %s107 = sphi 0, %s93
    %s111 = sphi 0, %s111
    %s113 = sphi 0, %s111
    %s114 = sphi 0, %s113
    %s128 = sphi 0, %s114
    %s134 = sphi 0, %s136
    %s137 = sphi 0, %s134
    %s138 = sphi 0, %s137
    %s154 = sphi 0, %s138
    %s160 = sphi 0, %s162
    %s163 = sphi 0, %s160
    %s164 = sphi 0, %s163
    %s180 = sphi 0, %s164
    %s186 = sphi 0, %s188
    %s189 = sphi 0, %s186
    %s190 = sphi 0, %s189
    %s206 = sphi 0, %s190
  $region4: #{double_conv.3} parent=0 // loop_header_branch
    %17 = sbr.rel (%p15) target = $region8
  $region5: #{double_conv.3} parent=0 // loop_body
    %s19 = ssub.s32 %s14, 1
    %s20 = ssub.s32 %s14, 2
    %s21 = sadd.s32 %s14, 1
    %s22 = ssub.s32 %s14, %s21
    %p23 = scmp.eq.s32.totalorder %s22, 0
    %s25 = sadd.s32 %s24, 1
    %s26 = scalar_select %p23, %s24, %s25
    %p29 = pneg %p23
    %p30 = scmp.eq.s32.totalorder %s14, 1
    %p31 = por %p29, %p30
    %p32 = scmp.ne.s32.totalorder %s24, %s27
    %p33 = scmp.eq.s32.totalorder %s14, 0
    %p34 = por %p32, %p33
    %p35 = scmp.ne.s32.totalorder %s24, %s27
    %p36 = scmp.eq.s32.totalorder %s19, 1
    %p37 = por %p35, %p36
    %p38 = scmp.ne.s32.totalorder %s27, %s28
    %p39 = scmp.eq.s32.totalorder %s19, 0
    %p40 = por %p38, %p39
    %p41 = scmp.ne.s32.totalorder %s27, %s28
    %p42 = scmp.eq.s32.totalorder %s20, 1
    %p43 = por %p41, %p42
    %p45 = scmp.ne.s32.totalorder %s28, %s44
    %p46 = scmp.eq.s32.totalorder %s20, 0
    %p47 = por %p45, %p46
    %s49 = sadd.s32 %s48, 1
    %p52 = scmp.eq.s32.totalorder %s14, 1
    %p53 = scmp.ne.s32.totalorder %s48, %s50
    %p54 = scmp.eq.s32.totalorder %s14, 0
    %p55 = por %p53, %p54
    %p56 = scmp.ne.s32.totalorder %s48, %s50
    %p57 = scmp.eq.s32.totalorder %s19, 1
    %p58 = por %p56, %p57
    %p59 = scmp.ne.s32.totalorder %s50, %s51
    %p60 = scmp.eq.s32.totalorder %s19, 0
    %p61 = por %p59, %p60
    %p62 = scmp.ne.s32.totalorder %s50, %s51
    %p63 = scmp.eq.s32.totalorder %s20, 1
    %p64 = por %p62, %p63
    %p66 = scmp.ne.s32.totalorder %s51, %s65
    %p67 = scmp.eq.s32.totalorder %s20, 0
    %p68 = por %p66, %p67
    %s70 = sadd.s32 %s69, 1
    %p73 = scmp.eq.s32.totalorder %s14, 1
    %p74 = scmp.ne.s32.totalorder %s69, %s71
    %p75 = scmp.eq.s32.totalorder %s14, 0
    %p76 = por %p74, %p75
    %p77 = scmp.ne.s32.totalorder %s69, %s71
    %p78 = scmp.eq.s32.totalorder %s19, 1
    %p79 = por %p77, %p78
    %p80 = scmp.ne.s32.totalorder %s71, %s72
    %p81 = scmp.eq.s32.totalorder %s19, 0
    %p82 = por %p80, %p81
    %p83 = scmp.ne.s32.totalorder %s71, %s72
    %p84 = scmp.eq.s32.totalorder %s20, 1
    %p85 = por %p83, %p84
    %p87 = scmp.ne.s32.totalorder %s72, %s86
    %p88 = scmp.eq.s32.totalorder %s20, 0
    %p89 = por %p87, %p88
    %s91 = sadd.s32 %s90, 1
    %p94 = scmp.eq.s32.totalorder %s14, 1
    %p95 = scmp.ne.s32.totalorder %s90, %s92
    %p96 = scmp.eq.s32.totalorder %s14, 0
    %p97 = por %p95, %p96
    %p98 = scmp.ne.s32.totalorder %s90, %s92
    %p99 = scmp.eq.s32.totalorder %s19, 1
    %p100 = por %p98, %p99
    %p101 = scmp.ne.s32.totalorder %s92, %s93
    %p102 = scmp.eq.s32.totalorder %s19, 0
    %p103 = por %p101, %p102
    %p104 = scmp.ne.s32.totalorder %s92, %s93
    %p105 = scmp.eq.s32.totalorder %s20, 1
    %p106 = por %p104, %p105
    %p108 = scmp.ne.s32.totalorder %s93, %s107
    %p109 = scmp.eq.s32.totalorder %s20, 0
    %p110 = por %p108, %p109
    %s112 = sadd.s32 %s111, 1
    %p115 = scmp.eq.s32.totalorder %s14, 1
    %p116 = scmp.ne.s32.totalorder %s111, %s113
    %p117 = scmp.eq.s32.totalorder %s14, 0
    %p118 = por %p116, %p117
    %p119 = scmp.ne.s32.totalorder %s111, %s113
    %p120 = scmp.eq.s32.totalorder %s19, 1
    %p121 = por %p119, %p120
    %p122 = scmp.ne.s32.totalorder %s113, %s114
    %p123 = scmp.eq.s32.totalorder %s19, 0
    %p124 = por %p122, %p123
    %p125 = scmp.ne.s32.totalorder %s113, %s114
    %p126 = scmp.eq.s32.totalorder %s20, 1
    %p127 = por %p125, %p126
    %p129 = scmp.ne.s32.totalorder %s114, %s128
    %p130 = scmp.eq.s32.totalorder %s20, 0
    %p131 = por %p129, %p130
    %s132 = ssub.s32 %s14, %s21
    %p133 = scmp.eq.s32.totalorder %s132, 0
    %s135 = sadd.s32 %s134, 1
    %s136 = scalar_select %p133, %s134, %s135
    %p139 = pneg %p133
    %p140 = scmp.eq.s32.totalorder %s14, 1
    %p141 = por %p139, %p140
    %p142 = scmp.ne.s32.totalorder %s134, %s137
    %p143 = scmp.eq.s32.totalorder %s14, 0
    %p144 = por %p142, %p143
    %p145 = scmp.ne.s32.totalorder %s134, %s137
    %p146 = scmp.eq.s32.totalorder %s19, 1
    %p147 = por %p145, %p146
    %p148 = scmp.ne.s32.totalorder %s137, %s138
    %p149 = scmp.eq.s32.totalorder %s19, 0
    %p150 = por %p148, %p149
    %p151 = scmp.ne.s32.totalorder %s137, %s138
    %p152 = scmp.eq.s32.totalorder %s20, 1
    %p153 = por %p151, %p152
    %p155 = scmp.ne.s32.totalorder %s138, %s154
    %p156 = scmp.eq.s32.totalorder %s20, 0
    %p157 = por %p155, %p156
    %s158 = ssub.s32 %s14, %s21
    %p159 = scmp.eq.s32.totalorder %s158, 0
    %s161 = sadd.s32 %s160, 1
    %s162 = scalar_select %p159, %s160, %s161
    %p165 = pneg %p159
    %p166 = scmp.eq.s32.totalorder %s14, 1
    %p167 = por %p165, %p166
    %p168 = scmp.ne.s32.totalorder %s160, %s163
    %p169 = scmp.eq.s32.totalorder %s14, 0
    %p170 = por %p168, %p169
    %p171 = scmp.ne.s32.totalorder %s160, %s163
    %p172 = scmp.eq.s32.totalorder %s19, 1
    %p173 = por %p171, %p172
    %p174 = scmp.ne.s32.totalorder %s163, %s164
    %p175 = scmp.eq.s32.totalorder %s19, 0
    %p176 = por %p174, %p175
    %p177 = scmp.ne.s32.totalorder %s163, %s164
    %p178 = scmp.eq.s32.totalorder %s20, 1
    %p179 = por %p177, %p178
    %p181 = scmp.ne.s32.totalorder %s164, %s180
    %p182 = scmp.eq.s32.totalorder %s20, 0
    %p183 = por %p181, %p182
    %s184 = ssub.s32 %s14, %s21
    %p185 = scmp.eq.s32.totalorder %s184, 0
    %s187 = sadd.s32 %s186, 1
    %s188 = scalar_select %p185, %s186, %s187
    %p191 = pneg %p185
    %p192 = scmp.eq.s32.totalorder %s14, 1
    %p193 = por %p191, %p192
    %p194 = scmp.ne.s32.totalorder %s186, %s189
    %p195 = scmp.eq.s32.totalorder %s14, 0
    %p196 = por %p194, %p195
    %p197 = scmp.ne.s32.totalorder %s186, %s189
    %p198 = scmp.eq.s32.totalorder %s19, 1
    %p199 = por %p197, %p198
    %p200 = scmp.ne.s32.totalorder %s189, %s190
    %p201 = scmp.eq.s32.totalorder %s19, 0
    %p202 = por %p200, %p201
    %p203 = scmp.ne.s32.totalorder %s189, %s190
    %p204 = scmp.eq.s32.totalorder %s20, 1
    %p205 = por %p203, %p204
    %p207 = scmp.ne.s32.totalorder %s190, %s206
    %p208 = scmp.eq.s32.totalorder %s20, 0
    %p209 = por %p207, %p208
    %p210 = scmp.le.s32.totalorder 1, %s14
    %p211 = scmp.lt.s32.totalorder %s14, 3
    %p212 = pnand %p210, %p211
    %p213 = pneg %p212
    // Predicated region
    $region9: #{double_conv.3} parent=5 // pred_check
      _
    $region10: #{double_conv.3} parent=5 // pred_check_branch
      %215 = sbr.rel (%p212) target = $region12
    $region11: #{double_conv.3} parent=5 // pred_region
      %s216 = ssub.s32 %s14, 1
      // Predicated region
      $region13: #{double_conv.3} parent=11 // pred_check
        %p217 = pneg %p61
      $region14: #{double_conv.3} parent=11 // pred_check_branch
        %219 = sbr.rel (%p217) target = $region16
      $region15: #{double_conv.3} parent=11 // pred_region
        _
      $region16: #{double_conv.3} parent=11 // pred_fallthru
        _
      // Predicated region
      $region17: #{double_conv.3} parent=11 // pred_check
        %p220 = pneg %p82
      $region18: #{double_conv.3} parent=11 // pred_check_branch
        %222 = sbr.rel (%p220) target = $region20
      $region19: #{double_conv.3} parent=11 // pred_region
        _
      $region20: #{double_conv.3} parent=11 // pred_fallthru
        _
      // Predicated region
      $region21: #{double_conv.3} parent=11 // pred_check
        %p223 = pneg %p103
      $region22: #{double_conv.3} parent=11 // pred_check_branch
        %225 = sbr.rel (%p223) target = $region24
      $region23: #{double_conv.3} parent=11 // pred_region
        _
      $region24: #{double_conv.3} parent=11 // pred_fallthru
        _
      // Predicated region
      $region25: #{double_conv.3} parent=11 // pred_check
        %p226 = pneg %p124
      $region26: #{double_conv.3} parent=11 // pred_check_branch
        %228 = sbr.rel (%p226) target = $region28
      $region27: #{double_conv.3} parent=11 // pred_region
        _
      $region28: #{double_conv.3} parent=11 // pred_fallthru
        _
    $region12: #{double_conv.3} parent=5 // pred_fallthru
      _
    %p229 = scmp.lt.s32.totalorder %s14, 2
    // Predicated region
    $region29: #{double_conv.3} parent=5 // pred_check
      %p230 = pneg %p229
    $region30: #{double_conv.3} parent=5 // pred_check_branch
      %232 = sbr.rel (%p230) target = $region32
    $region31: #{double_conv.3} parent=5 // pred_region
      // Predicated region
      $region33: #{double_conv.3} parent=31 // pred_check
        %p233 = pneg %p34
      $region34: #{double_conv.3} parent=31 // pred_check_branch
        %235 = sbr.rel (%p233) target = $region36
      $region35: #{double_conv.3} parent=31 // pred_region
        %p236 = scmp.lt.s32.totalorder %s14, 1
        %s237 = scalar_select %p236, %s14, 1
        %s238 = smul.addr %s237, 2
        %s239 = smul.addr %s238, 4
        %s240 = scalar_lea.vmem %s0, %s239
      $region36: #{double_conv.3} parent=31 // pred_fallthru
        _
    $region32: #{double_conv.3} parent=5 // pred_fallthru
      _
    %p241 = scmp.le.s32.totalorder 1, %s14
    %p242 = scmp.lt.s32.totalorder %s14, 3
    %p243 = pnand %p241, %p242
    %p244 = pneg %p243
    // Predicated region
    $region37: #{double_conv.3} parent=5 // pred_check
      _
    $region38: #{double_conv.3} parent=5 // pred_check_branch
      %246 = sbr.rel (%p243) target = $region40
    $region39: #{double_conv.3} parent=5 // pred_region
      %s247 = ssub.s32 %s14, 1
      %p248 = scmp.lt.s32.totalorder %s19, 1
      %s249 = scalar_select %p248, %s19, 1
      %s250 = smul.addr %s249, 2
      %s251 = smul.addr %s250, 4
      %s252 = scalar_lea.vmem %s0, %s251
      %p253 = pneg %p40
      %p254 = pneg %p37
      %p255 = pneg %p61
      %p256 = pneg %p58
      %p257 = pneg %p82
      %p258 = pneg %p79
      %p259 = pneg %p103
      %p260 = pneg %p100
      %p261 = pneg %p124
      %p262 = pneg %p121
      %p263 = pneg %p150
      %p264 = pneg %p147
      %p265 = scmp.lt.s32.totalorder %s19, 1
      %s266 = scalar_select %p265, %s19, 1
      %s267 = smul.addr %s266, 2
      %s268 = smul.addr %s267, 8
      %s269 = scalar_lea.vmem %s5, %s268
      %p270 = pneg %p176
      %p271 = pneg %p173
      %p272 = scmp.lt.s32.totalorder %s19, 1
      %s273 = scalar_select %p272, %s19, 1
      %s274 = smul.addr %s273, 8
      %s275 = scalar_lea.vmem %s6, %s274
      %p276 = pneg %p202
      %p277 = pneg %p199
      %p278 = scmp.lt.s32.totalorder %s19, 1
      %s279 = scalar_select %p278, %s19, 1
      %s280 = smul.addr %s279, 8
      %s281 = scalar_lea.vmem %s7, %s280
      %p282 = scmp.lt.s32.totalorder %s19, 1
      %s283 = scalar_select %p282, %s19, 1
      %s284 = smul.addr %s283, 2
      %s285 = smul.addr %s284, 4
      %s286 = scalar_lea.vmem %s0, %s285
      %p287 = scmp.lt.s32.totalorder %s19, 1
      %s288 = scalar_select %p287, %s19, 1
      %s289 = smul.addr %s288, 2
      %s290 = smul.addr %s289, 8
      %s291 = scalar_lea.vmem %s5, %s290
      %p292 = scmp.lt.s32.totalorder %s19, 1
      %s293 = scalar_select %p292, %s19, 1
      %s294 = smul.addr %s293, 8
      %s295 = scalar_lea.vmem %s6, %s294
      %p296 = scmp.lt.s32.totalorder %s19, 1
      %s297 = scalar_select %p296, %s19, 1
      %s298 = smul.addr %s297, 8
      %s299 = scalar_lea.vmem %s7, %s298
      %v301 = vld [vmem:[%s286] sm:$0xff]
      %v302 = vunpack.c.l.bf16 %v301
      %v303 = vunpack.c.h.bf16 %v301
      %v304 = vld [vmem:[%s1] sm:$0xff]
      %306 = vset.pattern.permute.xlu0 0
      %307 = vperm.xlu0 %306, %v304
      %v308 = vpop.permute.xlu0 %307
      %v310 = vmul.f32 %v302, %v308
      %v311 = vmul.f32 %v303, %v308
      %v312 = vld [vmem:[%s2] sm:$0xff]
      %314 = vset.pattern.permute.xlu0 0
      %315 = vperm.xlu0 %314, %v312
      %v316 = vpop.permute.xlu0 %315
      %v318 = vadd.f32 %v310, %v316
      %v319 = vadd.f32 %v311, %v316
      %v320 = vmax.f32 %v318, 0.0
      %v321 = vmax.f32 %v319, 0.0
      %322 = vst [vmem:[#allocation2] sm:$0xff] 0.0
      %323 = vst [vmem:[#allocation2 + $0x18] sm:$0xff] 0.0
      %324 = vst [vmem:[#allocation2 + $0x8] sm:$0xff] %v320
      %325 = vst [vmem:[#allocation2 + $0x10] sm:$0xff] %v321
      %v326 = vlaneseq
      %v327 = vand.u32 %v326, 127
      %v328 = vadd.s32 %v327, 128
      %vm329 = vcmp.lt.s32.totalorder %v327, 0
      %v330 = vsub.s32 0, %v327
      %v331 = vsel %vm329, %v330, %v327
      %v332 = vshrl.u32 %v331, 4
      %v333 = vand.u32 %v331, 15
      %v334 = vsub.s32 0, %v333
      %v335 = vsel %vm329, %v334, %v333
      %vm336 = vcmp.lt.s32.totalorder %v328, 0
      %v337 = vsub.s32 0, %v328
      %v338 = vsel %vm336, %v337, %v328
      %v339 = vshrl.u32 %v338, 4
      %v340 = vand.u32 %v338, 15
      %v341 = vsub.s32 0, %v340
      %v342 = vsel %vm336, %v341, %v340
      %vm343 = vcmp.ne.s32.totalorder %v335, 0
      %vm344 = vcmp.ne.s32.totalorder %v342, 0
      %vm345 = vcmp.lt.s32.totalorder %v335, 0
      %vm346 = vcmp.lt.s32.totalorder %v342, 0
      %vm347 = vmand %vm345, %vm343
      %vm348 = vmand %vm346, %vm344
      %v349 = vadd.s32 %v335, 16
      %v350 = vadd.s32 %v342, 16
      %v351 = vsel %vm347, %v349, %v335
      %v352 = vsel %vm348, %v350, %v342
      %vm353 = vcmp.ne.s32.totalorder %v351, 0
      %vm354 = vcmp.ne.s32.totalorder %v352, 0
      %vm355 = vcmp.ne.s32.totalorder %v351, 15
      %vm356 = vcmp.ne.s32.totalorder %v352, 15
      %v357 = vld [vmem:[#allocation2] sm:$0xff]
      %v358 = vld [vmem:[#allocation2 + $0x8] sm:$0xff]
      %v359 = vld [vmem:[#allocation2 + $0x10] sm:$0xff]
      %363 = vrot.lane.b32.xlu0 %v357, 17
      %v364 = vpop.permute.xlu0 %363
      %365 = vrot.lane.b32.xlu0 %v358, 17
      %v366 = vpop.permute.xlu0 %365
      %367 = vrot.lane.b32.xlu0 %v359, 17
      %v368 = vpop.permute.xlu0 %367
      %vm369 = vcmask 138240
      %v370 = vsel %vm369, %v364, %v366
      %v371 = vsel %vm369, %v366, %v368
      %v374 = vsel %vm353, %v370, 0.0
      %v375 = vsel %vm354, %v371, 0.0
      %376 = vst [vmem:[#allocation3] sm:$0xff] %v374
      %377 = vst [vmem:[#allocation3 + $0x8] sm:$0xff] %v375
      %v378 = vld [vmem:[#allocation2] sm:$0xff]
      %v379 = vld [vmem:[#allocation2 + $0x8] sm:$0xff]
      %v380 = vld [vmem:[#allocation2 + $0x10] sm:$0xff]
      %384 = vrot.lane.b32.xlu0 %v378, 16
      %v385 = vpop.permute.xlu0 %384
      %386 = vrot.lane.b32.xlu0 %v379, 16
      %v387 = vpop.permute.xlu0 %386
      %388 = vrot.lane.b32.xlu0 %v380, 16
      %v389 = vpop.permute.xlu0 %388
      %vm390 = vcmask 130048
      %v391 = vsel %vm390, %v385, %v387
      %v392 = vsel %vm390, %v387, %v389
      %395 = vst [vmem:[#allocation3 + $0x10] sm:$0xff] %v391
      %396 = vst [vmem:[#allocation3 + $0x18] sm:$0xff] %v392
      %v397 = vld [vmem:[#allocation2] sm:$0xff]
      %v398 = vld [vmem:[#allocation2 + $0x8] sm:$0xff]
      %v399 = vld [vmem:[#allocation2 + $0x10] sm:$0xff]
      %403 = vrot.lane.b32.xlu0 %v397, 15
      %v404 = vpop.permute.xlu0 %403
      %405 = vrot.lane.b32.xlu0 %v398, 15
      %v406 = vpop.permute.xlu0 %405
      %407 = vrot.lane.b32.xlu0 %v399, 15
      %v408 = vpop.permute.xlu0 %407
      %vm409 = vcmask 121856
      %v410 = vsel %vm409, %v404, %v406
      %v411 = vsel %vm409, %v406, %v408
      %v414 = vsel %vm355, %v410, 0.0
      %v415 = vsel %vm356, %v411, 0.0
      %416 = vst [vmem:[#allocation3 + $0x20] sm:$0xff] %v414
      %417 = vst [vmem:[#allocation3 + $0x28] sm:$0xff] %v415
      %v418 = vld [vmem:[#allocation2] sm:$0xff]
      %v419 = vld [vmem:[#allocation2 + $0x8] sm:$0xff]
      %v420 = vld [vmem:[#allocation2 + $0x10] sm:$0xff]
      %424 = vrot.lane.b32.xlu0 %v418, 1
      %v425 = vpop.permute.xlu0 %424
      %426 = vrot.lane.b32.xlu0 %v419, 1
      %v427 = vpop.permute.xlu0 %426
      %428 = vrot.lane.b32.xlu0 %v420, 1
      %v429 = vpop.permute.xlu0 %428
      %vm430 = vcmask 7168
      %v431 = vsel %vm430, %v425, %v427
      %v432 = vsel %vm430, %v427, %v429
      %v435 = vsel %vm353, %v431, 0.0
      %v436 = vsel %vm354, %v432, 0.0
      %437 = vst [vmem:[#allocation3 + $0x30] sm:$0xff] %v435
      %438 = vst [vmem:[#allocation3 + $0x38] sm:$0xff] %v436
      %v439 = vld [vmem:[#allocation2 + $0x8] sm:$0xff]
      %v440 = vld [vmem:[#allocation2 + $0x10] sm:$0xff]
      %441 = vst [vmem:[#allocation3 + $0x40] sm:$0xff] %v439
      %442 = vst [vmem:[#allocation3 + $0x48] sm:$0xff] %v440
      %v443 = vld [vmem:[#allocation2 + $0x8] sm:$0xff]
      %v444 = vld [vmem:[#allocation2 + $0x10] sm:$0xff]
      %v445 = vld [vmem:[#allocation2 + $0x18] sm:$0xff]
      %449 = vrot.lane.b32.xlu0 %v443, 127
      %v450 = vpop.permute.xlu0 %449
      %451 = vrot.lane.b32.xlu0 %v444, 127
      %v452 = vpop.permute.xlu0 %451
      %453 = vrot.lane.b32.xlu0 %v445, 127
      %v454 = vpop.permute.xlu0 %453
      %vm455 = vcmask 1039360
      %v456 = vsel %vm455, %v450, %v452
      %v457 = vsel %vm455, %v452, %v454
      %v460 = vsel %vm355, %v456, 0.0
      %v461 = vsel %vm356, %v457, 0.0
      %462 = vst [vmem:[#allocation3 + $0x50] sm:$0xff] %v460
      %463 = vst [vmem:[#allocation3 + $0x58] sm:$0xff] %v461
      %v464 = vld [vmem:[#allocation2 + $0x8] sm:$0xff]
      %v465 = vld [vmem:[#allocation2 + $0x10] sm:$0xff]
      %v466 = vld [vmem:[#allocation2 + $0x18] sm:$0xff]
      %470 = vrot.lane.b32.xlu0 %v464, 113
      %v471 = vpop.permute.xlu0 %470
      %472 = vrot.lane.b32.xlu0 %v465, 113
      %v473 = vpop.permute.xlu0 %472
      %474 = vrot.lane.b32.xlu0 %v466, 113
      %v475 = vpop.permute.xlu0 %474
      %vm476 = vcmask 924672
      %v477 = vsel %vm476, %v471, %v473
      %v478 = vsel %vm476, %v473, %v475
      %v481 = vsel %vm353, %v477, 0.0
      %v482 = vsel %vm354, %v478, 0.0
      %483 = vst [vmem:[#allocation3 + $0x60] sm:$0xff] %v481
      %484 = vst [vmem:[#allocation3 + $0x68] sm:$0xff] %v482
      %v485 = vld [vmem:[#allocation2 + $0x8] sm:$0xff]
      %v486 = vld [vmem:[#allocation2 + $0x10] sm:$0xff]
      %v487 = vld [vmem:[#allocation2 + $0x18] sm:$0xff]
      %491 = vrot.lane.b32.xlu0 %v485, 112
      %v492 = vpop.permute.xlu0 %491
      %493 = vrot.lane.b32.xlu0 %v486, 112
      %v494 = vpop.permute.xlu0 %493
      %495 = vrot.lane.b32.xlu0 %v487, 112
      %v496 = vpop.permute.xlu0 %495
      %vm497 = vcmask 916480
      %v498 = vsel %vm497, %v492, %v494
      %v499 = vsel %vm497, %v494, %v496
      %502 = vst [vmem:[#allocation3 + $0x70] sm:$0xff] %v498
      %503 = vst [vmem:[#allocation3 + $0x78] sm:$0xff] %v499
      %v504 = vld [vmem:[#allocation2 + $0x8] sm:$0xff]
      %v505 = vld [vmem:[#allocation2 + $0x10] sm:$0xff]
      %v506 = vld [vmem:[#allocation2 + $0x18] sm:$0xff]
      %510 = vrot.lane.b32.xlu0 %v504, 111
      %v511 = vpop.permute.xlu0 %510
      %512 = vrot.lane.b32.xlu0 %v505, 111
      %v513 = vpop.permute.xlu0 %512
      %514 = vrot.lane.b32.xlu0 %v506, 111
      %v515 = vpop.permute.xlu0 %514
      %vm516 = vcmask 908288
      %v517 = vsel %vm516, %v511, %v513
      %v518 = vsel %vm516, %v513, %v515
      %v521 = vsel %vm355, %v517, 0.0
      %v522 = vsel %vm356, %v518, 0.0
      %523 = vst [vmem:[#allocation3 + $0x80] sm:$0xff] %v521
      %524 = vst [vmem:[#allocation3 + $0x88] sm:$0xff] %v522
      %v525 = vld [vmem:[%s3] sm:$0xf]
      %v526 = vld [vmem:[#allocation3] sm:$0xff]
      %v527 = vld [vmem:[#allocation3 + $0x8] sm:$0xff]
      %v528 = vld [vmem:[#allocation3 + $0x10] sm:$0xff]
      %v529 = vld [vmem:[#allocation3 + $0x18] sm:$0xff]
      %v530 = vld [vmem:[#allocation3 + $0x20] sm:$0xff]
      %v531 = vld [vmem:[#allocation3 + $0x28] sm:$0xff]
      %v532 = vld [vmem:[#allocation3 + $0x30] sm:$0xff]
      %v533 = vld [vmem:[#allocation3 + $0x38] sm:$0xff]
      %v534 = vld [vmem:[#allocation3 + $0x40] sm:$0xff]
      %v535 = vld [vmem:[#allocation3 + $0x48] sm:$0xff]
      %v536 = vld [vmem:[#allocation3 + $0x50] sm:$0xff]
      %v537 = vld [vmem:[#allocation3 + $0x58] sm:$0xff]
      %v538 = vld [vmem:[#allocation3 + $0x60] sm:$0xff]
      %v539 = vld [vmem:[#allocation3 + $0x68] sm:$0xff]
      %v540 = vld [vmem:[#allocation3 + $0x70] sm:$0xff]
      %v541 = vld [vmem:[#allocation3 + $0x78] sm:$0xff]
      %v542 = vld [vmem:[#allocation3 + $0x80] sm:$0xff]
      %v543 = vld [vmem:[#allocation3 + $0x88] sm:$0xff]
      %v544 = vpack.c.bf16 %v528, %v526
      %v545 = vpack.c.bf16 %v529, %v527
      %v546 = vpack.c.bf16 %v532, %v530
      %v547 = vpack.c.bf16 %v533, %v531
      %v548 = vpack.c.bf16 %v536, %v534
      %v549 = vpack.c.bf16 %v537, %v535
      %v550 = vpack.c.bf16 %v540, %v538
      %v551 = vpack.c.bf16 %v541, %v539
      %v552 = vpack.c.bf16 %v542, %v542
      %v553 = vpack.c.bf16 %v543, %v543
      %v554 = vld [vmem:[%s4] sm:$0xff]
      %556 = vset.pattern.permute.xlu0 0
      %557 = vperm.xlu0 %556, %v554
      %v558 = vpop.permute.xlu0 %557
      %vm560 = vcmask 588800
      %v562 = vsel %vm560, %v525, 0
      %vm564 = vcmask 1043456
      %v566 = vsel %vm564, %v552, 0
      %v569 = vsel %vm564, %v553, 0
      %571 = vmatpush.bf16.msra.mxu0 0
      %572 = vmatpush.bf16.msra.mxu0 0
      %573 = vmatpush.bf16.msra.mxu0 0
      %574 = vmatpush.bf16.msra.mxu0 %v566
      %575 = vmatpush.bf16.msra.mxu0 %v550
      %576 = vmatpush.bf16.msra.mxu0 %v548
      %577 = vmatpush.bf16.msra.mxu0 %v546
      %578 = vmatpush.bf16.msra.mxu0 %v544
      %579 = vmatmul.bf16.gmra.mxu0 %v562
      %v580 = vpop.f32.mrf.mxu0
      %v581 = vadd.f32 %v558, %v580
      %v582 = vpop.f32.mrf.mxu0
      %583 = vdwg.mxu0
      %584 = vmatpush.bf16.msra.mxu0 0
      %585 = vmatpush.bf16.msra.mxu0 0
      %586 = vmatpush.bf16.msra.mxu0 0
      %587 = vmatpush.bf16.msra.mxu0 %v569
      %588 = vmatpush.bf16.msra.mxu0 %v551
      %589 = vmatpush.bf16.msra.mxu0 %v549
      %590 = vmatpush.bf16.msra.mxu0 %v547
      %591 = vmatpush.bf16.msra.mxu0 %v545
      %592 = vmatmul.bf16.gmra.mxu0 %v562
      %v593 = vpop.f32.mrf.mxu0
      %v594 = vadd.f32 %v558, %v593
      %v595 = vpop.f32.mrf.mxu0
      %596 = vdwg.mxu0
      %v597 = vadd.f32 %v581, %v594
      %598 = vadd.xlane.f32.xlu0 %v597
      %v599 = vpop.xlane.xlu0 %598
      %600 = vst.msk [vmem:[%s295] sm:$0xff] %vm430, %v599
      %v601 = vmul.f32 %v581, %v581
      %v602 = vmul.f32 %v594, %v594
      %v603 = vadd.f32 %v601, %v602
      %604 = vadd.xlane.f32.xlu0 %v603
      %v605 = vpop.xlane.xlu0 %604
      %606 = vst.msk [vmem:[%s299] sm:$0xff] %vm430, %v605
      %607 = vst [vmem:[%s291] sm:$0xff] %v581
      %608 = vst [vmem:[%s291 + $0x8] sm:$0xff] %v594
      %p609 = scmp.lt.s32.totalorder %s19, 1
      %s610 = scalar_select %p609, %s19, 1
      %s611 = smul.addr %s610, 2
      %s612 = smul.addr %s611, 8
      %s613 = scalar_lea.vmem %s5, %s612
      %p614 = scmp.lt.s32.totalorder %s19, 1
      %s615 = scalar_select %p614, %s19, 1
      %s616 = smul.addr %s615, 8
      %s617 = scalar_lea.vmem %s6, %s616
      %p618 = scmp.lt.s32.totalorder %s19, 1
      %s619 = scalar_select %p618, %s19, 1
      %s620 = smul.addr %s619, 8
      %s621 = scalar_lea.vmem %s7, %s620
      // Predicated region
      $region41: #{double_conv.3} parent=39 // pred_check
        %p622 = pneg %p147
      $region42: #{double_conv.3} parent=39 // pred_check_branch
        %624 = sbr.rel (%p622) target = $region44
      $region43: #{double_conv.3} parent=39 // pred_region
        _
      $region44: #{double_conv.3} parent=39 // pred_fallthru
        _
      // Predicated region
      $region45: #{double_conv.3} parent=39 // pred_check
        %p625 = pneg %p173
      $region46: #{double_conv.3} parent=39 // pred_check_branch
        %627 = sbr.rel (%p625) target = $region48
      $region47: #{double_conv.3} parent=39 // pred_region
        _
      $region48: #{double_conv.3} parent=39 // pred_fallthru
        _
      // Predicated region
      $region49: #{double_conv.3} parent=39 // pred_check
        %p628 = pneg %p199
      $region50: #{double_conv.3} parent=39 // pred_check_branch
        %630 = sbr.rel (%p628) target = $region52
      $region51: #{double_conv.3} parent=39 // pred_region
        _
      $region52: #{double_conv.3} parent=39 // pred_fallthru
        _
    $region40: #{double_conv.3} parent=5 // pred_fallthru
      _
    %p631 = scmp.le.s32.totalorder 2, %s14
    // Predicated region
    $region53: #{double_conv.3} parent=5 // pred_check
      %p632 = pneg %p631
    $region54: #{double_conv.3} parent=5 // pred_check_branch
      %634 = sbr.rel (%p632) target = $region56
    $region55: #{double_conv.3} parent=5 // pred_region
      %s635 = ssub.s32 %s14, 2
      // Predicated region
      $region57: #{double_conv.3} parent=55 // pred_check
        %p636 = pneg %p153
      $region58: #{double_conv.3} parent=55 // pred_check_branch
        %638 = sbr.rel (%p636) target = $region60
      $region59: #{double_conv.3} parent=55 // pred_region
        %p639 = scmp.lt.s32.totalorder %s20, 1
        %s640 = scalar_select %p639, %s20, 1
        %s641 = smul.addr %s640, 2
        %s642 = smul.addr %s641, 8
        %s643 = scalar_lea.vmem %s5, %s642
      $region60: #{double_conv.3} parent=55 // pred_fallthru
        _
      // Predicated region
      $region61: #{double_conv.3} parent=55 // pred_check
        %p644 = pneg %p179
      $region62: #{double_conv.3} parent=55 // pred_check_branch
        %646 = sbr.rel (%p644) target = $region64
      $region63: #{double_conv.3} parent=55 // pred_region
        %p647 = scmp.lt.s32.totalorder %s20, 1
        %s648 = scalar_select %p647, %s20, 1
        %s649 = smul.addr %s648, 8
        %s650 = scalar_lea.vmem %s6, %s649
      $region64: #{double_conv.3} parent=55 // pred_fallthru
        _
      // Predicated region
      $region65: #{double_conv.3} parent=55 // pred_check
        %p651 = pneg %p205
      $region66: #{double_conv.3} parent=55 // pred_check_branch
        %653 = sbr.rel (%p651) target = $region68
      $region67: #{double_conv.3} parent=55 // pred_region
        %p654 = scmp.lt.s32.totalorder %s20, 1
        %s655 = scalar_select %p654, %s20, 1
        %s656 = smul.addr %s655, 8
        %s657 = scalar_lea.vmem %s7, %s656
      $region68: #{double_conv.3} parent=55 // pred_fallthru
        _
    $region56: #{double_conv.3} parent=5 // pred_fallthru
      _
  $region6: #{double_conv.3} parent=0 // loop_footer
    %s18 = sadd.s32 1, %s14
  $region7: #{double_conv.3} parent=0 // loop_footer_branch
    %13 = sbr.rel target = $region3
  $region8: #{double_conv.3} parent=0 // loop_exit
    _

// kernel: double_conv.2
$region0: #{double_conv.2}
  #allocation0 [shape = 'u32[]', space=smem, size = 0x4, offset = 0x4, fixed_abs, tag = 'smem constant byte address 0x4 - core index']
  #allocation1 [shape = 'u32[72,128]{1,0:T(1,128)}', space=vmem, size = 0x9000, scoped, tag = 'internal scratch']
  #allocation2 [shape = 'f32[4,512]{1,0:T(4,128)}', space=vmem, size = 0x2000, scoped, tag = 'scratch operand']
  #allocation3 [shape = 'f32[36,256]{1,0:T(8,128)}', space=vmem, size = 0xa000, scoped, tag = 'scratch operand']
  %s0 = inlined_call_operand.vmem [shape: bf16[2,4,256], index: 0, kind: input, shape index: {}]
  %s1 = inlined_call_operand.vmem [shape: bf16[8,36], index: 1, kind: input, shape index: {}]
  %s2 = inlined_call_operand.vmem [shape: f32[8,1], index: 2, kind: input, shape index: {}]
  %s3 = inlined_call_operand.vmem [shape: bf16[2,8,256], index: 3, kind: output, shape index: {0}]
  %s4 = inlined_call_operand.vmem [shape: f32[2,8,1], index: 4, kind: output, shape index: {1}]
  %s5 = inlined_call_operand.vmem [shape: f32[2,8,1], index: 5, kind: output, shape index: {2}]
  %6 = xla_tuple %s3, %s4, %s5
  %s7 = sld [smem:[#allocation0]]
  $region61: #{double_conv.2} parent=0
    _
  %s9 = ssub.s32 1, %s7
  %s10 = scalar_select 0, %s9, %s7
  loop: start=0, step=1, limit=4
  $region2: #{double_conv.2} parent=0 // loop_pre_header
    _
  $region3: #{double_conv.2} parent=0 // loop_header
    %s12 = sphi 0, %s16
    %p13 = scmp.ge.s32.totalorder %s12, 4
    %s22 = sphi 0, %s24
    %s25 = sphi 0, %s22
    %s26 = sphi 0, %s25
    %s42 = sphi 0, %s26
    %s46 = sphi 0, %s46
    %s48 = sphi 0, %s46
    %s49 = sphi 0, %s48
    %s63 = sphi 0, %s49
    %s67 = sphi 0, %s67
    %s69 = sphi 0, %s67
    %s70 = sphi 0, %s69
    %s84 = sphi 0, %s70
    %s90 = sphi 0, %s92
    %s93 = sphi 0, %s90
    %s94 = sphi 0, %s93
    %s110 = sphi 0, %s94
    %s116 = sphi 0, %s118
    %s119 = sphi 0, %s116
    %s120 = sphi 0, %s119
    %s136 = sphi 0, %s120
    %s142 = sphi 0, %s144
    %s145 = sphi 0, %s142
    %s146 = sphi 0, %s145
    %s162 = sphi 0, %s146
  $region4: #{double_conv.2} parent=0 // loop_header_branch
    %15 = sbr.rel (%p13) target = $region8
  $region5: #{double_conv.2} parent=0 // loop_body
    %s17 = ssub.s32 %s12, 1
    %s18 = ssub.s32 %s12, 2
    %s19 = sadd.s32 %s12, 1
    %s20 = ssub.s32 %s12, %s19
    %p21 = scmp.eq.s32.totalorder %s20, 0
    %s23 = sadd.s32 %s22, 1
    %s24 = scalar_select %p21, %s22, %s23
    %p27 = pneg %p21
    %p28 = scmp.eq.s32.totalorder %s12, 1
    %p29 = por %p27, %p28
    %p30 = scmp.ne.s32.totalorder %s22, %s25
    %p31 = scmp.eq.s32.totalorder %s12, 0
    %p32 = por %p30, %p31
    %p33 = scmp.ne.s32.totalorder %s22, %s25
    %p34 = scmp.eq.s32.totalorder %s17, 1
    %p35 = por %p33, %p34
    %p36 = scmp.ne.s32.totalorder %s25, %s26
    %p37 = scmp.eq.s32.totalorder %s17, 0
    %p38 = por %p36, %p37
    %p39 = scmp.ne.s32.totalorder %s25, %s26
    %p40 = scmp.eq.s32.totalorder %s18, 1
    %p41 = por %p39, %p40
    %p43 = scmp.ne.s32.totalorder %s26, %s42
    %p44 = scmp.eq.s32.totalorder %s18, 0
    %p45 = por %p43, %p44
    %s47 = sadd.s32 %s46, 1
    %p50 = scmp.eq.s32.totalorder %s12, 1
    %p51 = scmp.ne.s32.totalorder %s46, %s48
    %p52 = scmp.eq.s32.totalorder %s12, 0
    %p53 = por %p51, %p52
    %p54 = scmp.ne.s32.totalorder %s46, %s48
    %p55 = scmp.eq.s32.totalorder %s17, 1
    %p56 = por %p54, %p55
    %p57 = scmp.ne.s32.totalorder %s48, %s49
    %p58 = scmp.eq.s32.totalorder %s17, 0
    %p59 = por %p57, %p58
    %p60 = scmp.ne.s32.totalorder %s48, %s49
    %p61 = scmp.eq.s32.totalorder %s18, 1
    %p62 = por %p60, %p61
    %p64 = scmp.ne.s32.totalorder %s49, %s63
    %p65 = scmp.eq.s32.totalorder %s18, 0
    %p66 = por %p64, %p65
    %s68 = sadd.s32 %s67, 1
    %p71 = scmp.eq.s32.totalorder %s12, 1
    %p72 = scmp.ne.s32.totalorder %s67, %s69
    %p73 = scmp.eq.s32.totalorder %s12, 0
    %p74 = por %p72, %p73
    %p75 = scmp.ne.s32.totalorder %s67, %s69
    %p76 = scmp.eq.s32.totalorder %s17, 1
    %p77 = por %p75, %p76
    %p78 = scmp.ne.s32.totalorder %s69, %s70
    %p79 = scmp.eq.s32.totalorder %s17, 0
    %p80 = por %p78, %p79
    %p81 = scmp.ne.s32.totalorder %s69, %s70
    %p82 = scmp.eq.s32.totalorder %s18, 1
    %p83 = por %p81, %p82
    %p85 = scmp.ne.s32.totalorder %s70, %s84
    %p86 = scmp.eq.s32.totalorder %s18, 0
    %p87 = por %p85, %p86
    %s88 = ssub.s32 %s12, %s19
    %p89 = scmp.eq.s32.totalorder %s88, 0
    %s91 = sadd.s32 %s90, 1
    %s92 = scalar_select %p89, %s90, %s91
    %p95 = pneg %p89
    %p96 = scmp.eq.s32.totalorder %s12, 1
    %p97 = por %p95, %p96
    %p98 = scmp.ne.s32.totalorder %s90, %s93
    %p99 = scmp.eq.s32.totalorder %s12, 0
    %p100 = por %p98, %p99
    %p101 = scmp.ne.s32.totalorder %s90, %s93
    %p102 = scmp.eq.s32.totalorder %s17, 1
    %p103 = por %p101, %p102
    %p104 = scmp.ne.s32.totalorder %s93, %s94
    %p105 = scmp.eq.s32.totalorder %s17, 0
    %p106 = por %p104, %p105
    %p107 = scmp.ne.s32.totalorder %s93, %s94
    %p108 = scmp.eq.s32.totalorder %s18, 1
    %p109 = por %p107, %p108
    %p111 = scmp.ne.s32.totalorder %s94, %s110
    %p112 = scmp.eq.s32.totalorder %s18, 0
    %p113 = por %p111, %p112
    %s114 = ssub.s32 %s12, %s19
    %p115 = scmp.eq.s32.totalorder %s114, 0
    %s117 = sadd.s32 %s116, 1
    %s118 = scalar_select %p115, %s116, %s117
    %p121 = pneg %p115
    %p122 = scmp.eq.s32.totalorder %s12, 1
    %p123 = por %p121, %p122
    %p124 = scmp.ne.s32.totalorder %s116, %s119
    %p125 = scmp.eq.s32.totalorder %s12, 0
    %p126 = por %p124, %p125
    %p127 = scmp.ne.s32.totalorder %s116, %s119
    %p128 = scmp.eq.s32.totalorder %s17, 1
    %p129 = por %p127, %p128
    %p130 = scmp.ne.s32.totalorder %s119, %s120
    %p131 = scmp.eq.s32.totalorder %s17, 0
    %p132 = por %p130, %p131
    %p133 = scmp.ne.s32.totalorder %s119, %s120
    %p134 = scmp.eq.s32.totalorder %s18, 1
    %p135 = por %p133, %p134
    %p137 = scmp.ne.s32.totalorder %s120, %s136
    %p138 = scmp.eq.s32.totalorder %s18, 0
    %p139 = por %p137, %p138
    %s140 = ssub.s32 %s12, %s19
    %p141 = scmp.eq.s32.totalorder %s140, 0
    %s143 = sadd.s32 %s142, 1
    %s144 = scalar_select %p141, %s142, %s143
    %p147 = pneg %p141
    %p148 = scmp.eq.s32.totalorder %s12, 1
    %p149 = por %p147, %p148
    %p150 = scmp.ne.s32.totalorder %s142, %s145
    %p151 = scmp.eq.s32.totalorder %s12, 0
    %p152 = por %p150, %p151
    %p153 = scmp.ne.s32.totalorder %s142, %s145
    %p154 = scmp.eq.s32.totalorder %s17, 1
    %p155 = por %p153, %p154
    %p156 = scmp.ne.s32.totalorder %s145, %s146
    %p157 = scmp.eq.s32.totalorder %s17, 0
    %p158 = por %p156, %p157
    %p159 = scmp.ne.s32.totalorder %s145, %s146
    %p160 = scmp.eq.s32.totalorder %s18, 1
    %p161 = por %p159, %p160
    %p163 = scmp.ne.s32.totalorder %s146, %s162
    %p164 = scmp.eq.s32.totalorder %s18, 0
    %p165 = por %p163, %p164
    %p166 = scmp.le.s32.totalorder 1, %s12
    %p167 = scmp.lt.s32.totalorder %s12, 3
    %p168 = pnand %p166, %p167
    %p169 = pneg %p168
    // Predicated region
    $region9: #{double_conv.2} parent=5 // pred_check
      _
    $region10: #{double_conv.2} parent=5 // pred_check_branch
      %171 = sbr.rel (%p168) target = $region12
    $region11: #{double_conv.2} parent=5 // pred_region
      %s172 = ssub.s32 %s12, 1
      // Predicated region
      $region13: #{double_conv.2} parent=11 // pred_check
        %p173 = pneg %p59
      $region14: #{double_conv.2} parent=11 // pred_check_branch
        %175 = sbr.rel (%p173) target = $region16
      $region15: #{double_conv.2} parent=11 // pred_region
        _
      $region16: #{double_conv.2} parent=11 // pred_fallthru
        _
      // Predicated region
      $region17: #{double_conv.2} parent=11 // pred_check
        %p176 = pneg %p80
      $region18: #{double_conv.2} parent=11 // pred_check_branch
        %178 = sbr.rel (%p176) target = $region20
      $region19: #{double_conv.2} parent=11 // pred_region
        _
      $region20: #{double_conv.2} parent=11 // pred_fallthru
        _
    $region12: #{double_conv.2} parent=5 // pred_fallthru
      _
    %p179 = scmp.lt.s32.totalorder %s12, 2
    // Predicated region
    $region21: #{double_conv.2} parent=5 // pred_check
      %p180 = pneg %p179
    $region22: #{double_conv.2} parent=5 // pred_check_branch
      %182 = sbr.rel (%p180) target = $region24
    $region23: #{double_conv.2} parent=5 // pred_region
      // Predicated region
      $region25: #{double_conv.2} parent=23 // pred_check
        %p183 = pneg %p32
      $region26: #{double_conv.2} parent=23 // pred_check_branch
        %185 = sbr.rel (%p183) target = $region28
      $region27: #{double_conv.2} parent=23 // pred_region
        %p186 = scmp.lt.s32.totalorder %s12, 1
        %s187 = scalar_select %p186, %s12, 1
        %s188 = smul.addr %s187, 2
        %s189 = smul.addr %s188, 2
        %s190 = scalar_lea.vmem %s0, %s189
      $region28: #{double_conv.2} parent=23 // pred_fallthru
        _
    $region24: #{double_conv.2} parent=5 // pred_fallthru
      _
    %p191 = scmp.le.s32.totalorder 1, %s12
    %p192 = scmp.lt.s32.totalorder %s12, 3
    %p193 = pnand %p191, %p192
    %p194 = pneg %p193
    // Predicated region
    $region29: #{double_conv.2} parent=5 // pred_check
      _
    $region30: #{double_conv.2} parent=5 // pred_check_branch
      %196 = sbr.rel (%p193) target = $region32
    $region31: #{double_conv.2} parent=5 // pred_region
      %s197 = ssub.s32 %s12, 1
      %p198 = scmp.lt.s32.totalorder %s17, 1
      %s199 = scalar_select %p198, %s17, 1
      %s200 = smul.addr %s199, 2
      %s201 = smul.addr %s200, 2
      %s202 = scalar_lea.vmem %s0, %s201
      %p203 = pneg %p38
      %p204 = pneg %p35
      %p205 = pneg %p59
      %p206 = pneg %p56
      %p207 = pneg %p80
      %p208 = pneg %p77
      %p209 = pneg %p106
      %p210 = pneg %p103
      %p211 = scmp.lt.s32.totalorder %s17, 1
      %s212 = scalar_select %p211, %s17, 1
      %s213 = smul.addr %s212, 2
      %s214 = smul.addr %s213, 4
      %s215 = scalar_lea.vmem %s3, %s214
      %p216 = pneg %p132
      %p217 = pneg %p129
      %p218 = scmp.lt.s32.totalorder %s17, 1
      %s219 = scalar_select %p218, %s17, 1
      %s220 = smul.addr %s219, 8
      %s221 = scalar_lea.vmem %s4, %s220
      %p222 = pneg %p158
      %p223 = pneg %p155
      %p224 = scmp.lt.s32.totalorder %s17, 1
      %s225 = scalar_select %p224, %s17, 1
      %s226 = smul.addr %s225, 8
      %s227 = scalar_lea.vmem %s5, %s226
      %p228 = scmp.lt.s32.totalorder %s17, 1
      %s229 = scalar_select %p228, %s17, 1
      %s230 = smul.addr %s229, 2
      %s231 = smul.addr %s230, 2
      %s232 = scalar_lea.vmem %s0, %s231
      %p233 = scmp.lt.s32.totalorder %s17, 1
      %s234 = scalar_select %p233, %s17, 1
      %s235 = smul.addr %s234, 2
      %s236 = smul.addr %s235, 4
      %s237 = scalar_lea.vmem %s3, %s236
      %p238 = scmp.lt.s32.totalorder %s17, 1
      %s239 = scalar_select %p238, %s17, 1
      %s240 = smul.addr %s239, 8
      %s241 = scalar_lea.vmem %s4, %s240
      %p242 = scmp.lt.s32.totalorder %s17, 1
      %s243 = scalar_select %p242, %s17, 1
      %s244 = smul.addr %s243, 8
      %s245 = scalar_lea.vmem %s5, %s244
      %v247 = vld [vmem:[%s232] sm:$0xf]
      %v248 = vunpack.c.l.bf16 %v247
      %249 = vst [vmem:[#allocation2] sm:$0xf] 0.0
      %250 = vst [vmem:[#allocation2 + $0xc] sm:$0xf] 0.0
      %251 = vst [vmem:[#allocation2 + $0x4] sm:$0xff] %v248
      %v252 = vlaneseq
      %v253 = vand.u32 %v252, 127
      %v254 = vadd.s32 %v253, 128
      %vm255 = vcmp.lt.s32.totalorder %v253, 0
      %v256 = vsub.s32 0, %v253
      %v257 = vsel %vm255, %v256, %v253
      %v258 = vshrl.u32 %v257, 4
      %v259 = vand.u32 %v257, 15
      %v260 = vsub.s32 0, %v259
      %v261 = vsel %vm255, %v260, %v259
      %vm262 = vcmp.lt.s32.totalorder %v254, 0
      %v263 = vsub.s32 0, %v254
      %v264 = vsel %vm262, %v263, %v254
      %v265 = vshrl.u32 %v264, 4
      %v266 = vand.u32 %v264, 15
      %v267 = vsub.s32 0, %v266
      %v268 = vsel %vm262, %v267, %v266
      %vm269 = vcmp.ne.s32.totalorder %v261, 0
      %vm270 = vcmp.ne.s32.totalorder %v268, 0
      %vm271 = vcmp.lt.s32.totalorder %v261, 0
      %vm272 = vcmp.lt.s32.totalorder %v268, 0
      %vm273 = vmand %vm271, %vm269
      %vm274 = vmand %vm272, %vm270
      %v275 = vadd.s32 %v261, 16
      %v276 = vadd.s32 %v268, 16
      %v277 = vsel %vm273, %v275, %v261
      %v278 = vsel %vm274, %v276, %v268
      %vm279 = vcmp.ne.s32.totalorder %v277, 0
      %vm280 = vcmp.ne.s32.totalorder %v278, 0
      %vm281 = vcmp.ne.s32.totalorder %v277, 15
      %vm282 = vcmp.ne.s32.totalorder %v278, 15
      %v283 = vld [vmem:[#allocation2] sm:$0xff]
      %v284 = vld [vmem:[#allocation2 + $0x8] sm:$0xf]
      %287 = vst [vmem:[#allocation1] ss:$2 sm:$0xff] %v283
      %s288 = scalar_lea.vmem [#allocation1], 16
      %289 = vst [vmem:[%s288] ss:$2 sm:$0xff] %v284
      %v290 = vld.sshfl [vmem:[#allocation1] sm:$0xff pattern:$0x75316420]
      %v291 = vld.sshfl [vmem:[#allocation1 + $0x8] sm:$0xff pattern:$0x75316420]
      %v292 = vld.sshfl [vmem:[#allocation1 + $0x10] sm:$0xff pattern:$0x75316420]
      %293 = vrot.lane.b32.xlu0 %v290, 17
      %v294 = vpop.permute.xlu0 %293
      %295 = vrot.lane.b32.xlu0 %v291, 17
      %v296 = vpop.permute.xlu0 %295
      %297 = vrot.lane.b32.xlu0 %v292, 17
      %v298 = vpop.permute.xlu0 %297
      %vm299 = vcmask 138240
      %v300 = vsel %vm299, %v294, %v296
      %v301 = vsel %vm299, %v296, %v298
      %v304 = vsel %vm279, %v300, 0.0
      %v305 = vsel %vm280, %v301, 0.0
      %306 = vst [vmem:[#allocation3] sm:$0xf] %v304
      %307 = vst [vmem:[#allocation3 + $0x8] sm:$0xf] %v305
      %v308 = vld [vmem:[#allocation2] sm:$0xff]
      %v309 = vld [vmem:[#allocation2 + $0x8] sm:$0xf]
      %s312 = scalar_lea.vmem [#allocation1], 1
      %313 = vst [vmem:[%s312] ss:$2 sm:$0xff] %v308
      %s314 = scalar_lea.vmem [#allocation1], 17
      %315 = vst [vmem:[%s314] ss:$2 sm:$0xff] %v309
      %v316 = vld.sshfl [vmem:[#allocation1] sm:$0xff pattern:$0x75316420]
      %v317 = vld.sshfl [vmem:[#allocation1 + $0x8] sm:$0xff pattern:$0x75316420]
      %v318 = vld.sshfl [vmem:[#allocation1 + $0x10] sm:$0xff pattern:$0x75316420]
      %319 = vrot.lane.b32.xlu0 %v316, 16
      %v320 = vpop.permute.xlu0 %319
      %321 = vrot.lane.b32.xlu0 %v317, 16
      %v322 = vpop.permute.xlu0 %321
      %323 = vrot.lane.b32.xlu0 %v318, 16
      %v324 = vpop.permute.xlu0 %323
      %vm325 = vcmask 130048
      %v326 = vsel %vm325, %v320, %v322
      %v327 = vsel %vm325, %v322, %v324
      %330 = vst [vmem:[#allocation3] sm:$0xf0] %v326
      %331 = vst [vmem:[#allocation3 + $0x8] sm:$0xf0] %v327
      %v332 = vld [vmem:[#allocation2] sm:$0xff]
      %v333 = vld [vmem:[#allocation2 + $0x8] sm:$0xf]
      %336 = vst [vmem:[#allocation1] ss:$2 sm:$0xff] %v332
      %s337 = scalar_lea.vmem [#allocation1], 16
      %338 = vst [vmem:[%s337] ss:$2 sm:$0xff] %v333
      %v339 = vld.sshfl [vmem:[#allocation1] sm:$0xff pattern:$0x75316420]
      %v340 = vld.sshfl [vmem:[#allocation1 + $0x8] sm:$0xff pattern:$0x75316420]
      %v341 = vld.sshfl [vmem:[#allocation1 + $0x10] sm:$0xff pattern:$0x75316420]
      %342 = vrot.lane.b32.xlu0 %v339, 15
      %v343 = vpop.permute.xlu0 %342
      %344 = vrot.lane.b32.xlu0 %v340, 15
      %v345 = vpop.permute.xlu0 %344
      %346 = vrot.lane.b32.xlu0 %v341, 15
      %v347 = vpop.permute.xlu0 %346
      %vm348 = vcmask 121856
      %v349 = vsel %vm348, %v343, %v345
      %v350 = vsel %vm348, %v345, %v347
      %v353 = vsel %vm281, %v349, 0.0
      %v354 = vsel %vm282, %v350, 0.0
      %355 = vst [vmem:[#allocation3 + $0x10] sm:$0xf] %v353
      %356 = vst [vmem:[#allocation3 + $0x18] sm:$0xf] %v354
      %v357 = vld [vmem:[#allocation2] sm:$0xff]
      %v358 = vld [vmem:[#allocation2 + $0x8] sm:$0xf]
      %361 = vst [vmem:[#allocation1] ss:$2 sm:$0xff] %v357
      %s362 = scalar_lea.vmem [#allocation1], 16
      %363 = vst [vmem:[%s362] ss:$2 sm:$0xff] %v358
      %v364 = vld.sshfl [vmem:[#allocation1] sm:$0xff pattern:$0x75316420]
      %v365 = vld.sshfl [vmem:[#allocation1 + $0x8] sm:$0xff pattern:$0x75316420]
      %v366 = vld.sshfl [vmem:[#allocation1 + $0x10] sm:$0xff pattern:$0x75316420]
      %367 = vrot.lane.b32.xlu0 %v364, 1
      %v368 = vpop.permute.xlu0 %367
      %369 = vrot.lane.b32.xlu0 %v365, 1
      %v370 = vpop.permute.xlu0 %369
      %371 = vrot.lane.b32.xlu0 %v366, 1
      %v372 = vpop.permute.xlu0 %371
      %vm373 = vcmask 7168
      %v374 = vsel %vm373, %v368, %v370
      %v375 = vsel %vm373, %v370, %v372
      %v378 = vsel %vm279, %v374, 0.0
      %v379 = vsel %vm280, %v375, 0.0
      %v382 = vrot.slane %v378, 4
      %v383 = vrot.slane %v379, 4
      %386 = vst [vmem:[#allocation3 + $0x10] sm:$0xf0] %v382
      %387 = vst [vmem:[#allocation3 + $0x18] sm:$0xf0] %v383
      %v388 = vld [vmem:[#allocation2 + $0x4] sm:$0xff]
      %390 = vst [vmem:[#allocation1] ss:$2 sm:$0xff] %v388
      %v391 = vld.sshfl [vmem:[#allocation1] sm:$0xff pattern:$0x75316420]
      %v392 = vld.sshfl [vmem:[#allocation1 + $0x8] sm:$0xff pattern:$0x75316420]
      %395 = vst [vmem:[#allocation3 + $0x20] sm:$0xf] %v391
      %396 = vst [vmem:[#allocation3 + $0x28] sm:$0xf] %v392
      %v397 = vld [vmem:[#allocation2 + $0x4] sm:$0xff]
      %v398 = vld [vmem:[#allocation2 + $0xc] sm:$0xf]
      %401 = vst [vmem:[#allocation1] ss:$2 sm:$0xff] %v397
      %s402 = scalar_lea.vmem [#allocation1], 16
      %403 = vst [vmem:[%s402] ss:$2 sm:$0xff] %v398
      %v404 = vld.sshfl [vmem:[#allocation1] sm:$0xff pattern:$0x75316420]
      %v405 = vld.sshfl [vmem:[#allocation1 + $0x8] sm:$0xff pattern:$0x75316420]
      %v406 = vld.sshfl [vmem:[#allocation1 + $0x10] sm:$0xff pattern:$0x75316420]
      %407 = vrot.lane.b32.xlu0 %v404, 127
      %v408 = vpop.permute.xlu0 %407
      %409 = vrot.lane.b32.xlu0 %v405, 127
      %v410 = vpop.permute.xlu0 %409
      %411 = vrot.lane.b32.xlu0 %v406, 127
      %v412 = vpop.permute.xlu0 %411
      %vm413 = vcmask 1039360
      %v414 = vsel %vm413, %v408, %v410
      %v415 = vsel %vm413, %v410, %v412
      %v418 = vsel %vm281, %v414, 0.0
      %v419 = vsel %vm282, %v415, 0.0
      %v422 = vrot.slane %v418, 4
      %v423 = vrot.slane %v419, 4
      %426 = vst [vmem:[#allocation3 + $0x20] sm:$0xf0] %v422
      %427 = vst [vmem:[#allocation3 + $0x28] sm:$0xf0] %v423
      %v428 = vld [vmem:[#allocation2 + $0x4] sm:$0xff]
      %v429 = vld [vmem:[#allocation2 + $0xc] sm:$0xf]
      %432 = vst [vmem:[#allocation1] ss:$2 sm:$0xff] %v428
      %s433 = scalar_lea.vmem [#allocation1], 16
      %434 = vst [vmem:[%s433] ss:$2 sm:$0xff] %v429
      %v435 = vld.sshfl [vmem:[#allocation1] sm:$0xff pattern:$0x75316420]
      %v436 = vld.sshfl [vmem:[#allocation1 + $0x8] sm:$0xff pattern:$0x75316420]
      %v437 = vld.sshfl [vmem:[#allocation1 + $0x10] sm:$0xff pattern:$0x75316420]
      %438 = vrot.lane.b32.xlu0 %v435, 113
      %v439 = vpop.permute.xlu0 %438
      %440 = vrot.lane.b32.xlu0 %v436, 113
      %v441 = vpop.permute.xlu0 %440
      %442 = vrot.lane.b32.xlu0 %v437, 113
      %v443 = vpop.permute.xlu0 %442
      %vm444 = vcmask 924672
      %v445 = vsel %vm444, %v439, %v441
      %v446 = vsel %vm444, %v441, %v443
      %v449 = vsel %vm279, %v445, 0.0
      %v450 = vsel %vm280, %v446, 0.0
      %451 = vst [vmem:[#allocation3 + $0x30] sm:$0xf] %v449
      %452 = vst [vmem:[#allocation3 + $0x38] sm:$0xf] %v450
      %v453 = vld [vmem:[#allocation2 + $0x4] sm:$0xff]
      %v454 = vld [vmem:[#allocation2 + $0xc] sm:$0xf]
      %s457 = scalar_lea.vmem [#allocation1], 1
      %458 = vst [vmem:[%s457] ss:$2 sm:$0xff] %v453
      %s459 = scalar_lea.vmem [#allocation1], 17
      %460 = vst [vmem:[%s459] ss:$2 sm:$0xff] %v454
      %v461 = vld.sshfl [vmem:[#allocation1] sm:$0xff pattern:$0x75316420]
      %v462 = vld.sshfl [vmem:[#allocation1 + $0x8] sm:$0xff pattern:$0x75316420]
      %v463 = vld.sshfl [vmem:[#allocation1 + $0x10] sm:$0xff pattern:$0x75316420]
      %464 = vrot.lane.b32.xlu0 %v461, 112
      %v465 = vpop.permute.xlu0 %464
      %466 = vrot.lane.b32.xlu0 %v462, 112
      %v467 = vpop.permute.xlu0 %466
      %468 = vrot.lane.b32.xlu0 %v463, 112
      %v469 = vpop.permute.xlu0 %468
      %vm470 = vcmask 916480
      %v471 = vsel %vm470, %v465, %v467
      %v472 = vsel %vm470, %v467, %v469
      %475 = vst [vmem:[#allocation3 + $0x30] sm:$0xf0] %v471
      %476 = vst [vmem:[#allocation3 + $0x38] sm:$0xf0] %v472
      %v477 = vld [vmem:[#allocation2 + $0x4] sm:$0xff]
      %v478 = vld [vmem:[#allocation2 + $0xc] sm:$0xf]
      %481 = vst [vmem:[#allocation1] ss:$2 sm:$0xff] %v477
      %s482 = scalar_lea.vmem [#allocation1], 16
      %483 = vst [vmem:[%s482] ss:$2 sm:$0xff] %v478
      %v484 = vld.sshfl [vmem:[#allocation1] sm:$0xff pattern:$0x75316420]
      %v485 = vld.sshfl [vmem:[#allocation1 + $0x8] sm:$0xff pattern:$0x75316420]
      %v486 = vld.sshfl [vmem:[#allocation1 + $0x10] sm:$0xff pattern:$0x75316420]
      %487 = vrot.lane.b32.xlu0 %v484, 111
      %v488 = vpop.permute.xlu0 %487
      %489 = vrot.lane.b32.xlu0 %v485, 111
      %v490 = vpop.permute.xlu0 %489
      %491 = vrot.lane.b32.xlu0 %v486, 111
      %v492 = vpop.permute.xlu0 %491
      %vm493 = vcmask 908288
      %v494 = vsel %vm493, %v488, %v490
      %v495 = vsel %vm493, %v490, %v492
      %v498 = vsel %vm281, %v494, 0.0
      %v499 = vsel %vm282, %v495, 0.0
      %500 = vst [vmem:[#allocation3 + $0x40] sm:$0xf] %v498
      %501 = vst [vmem:[#allocation3 + $0x48] sm:$0xf] %v499
      %v502 = vld [vmem:[%s1] sm:$0xf]
      %v503 = vld [vmem:[#allocation3] sm:$0xff]
      %v504 = vld [vmem:[#allocation3 + $0x8] sm:$0xff]
      %v505 = vld [vmem:[#allocation3 + $0x10] sm:$0xff]
      %v506 = vld [vmem:[#allocation3 + $0x18] sm:$0xff]
      %v507 = vld [vmem:[#allocation3 + $0x20] sm:$0xff]
      %v508 = vld [vmem:[#allocation3 + $0x28] sm:$0xff]
      %v509 = vld [vmem:[#allocation3 + $0x30] sm:$0xff]
      %v510 = vld [vmem:[#allocation3 + $0x38] sm:$0xff]
      %v511 = vld [vmem:[#allocation3 + $0x40] sm:$0xf]
      %v512 = vld [vmem:[#allocation3 + $0x48] sm:$0xf]
      %v513 = vpack.c.bf16 %v505, %v503
      %v514 = vpack.c.bf16 %v506, %v504
      %v515 = vpack.c.bf16 %v509, %v507
      %v516 = vpack.c.bf16 %v510, %v508
      %v517 = vpack.c.bf16 %v511, %v511
      %v518 = vpack.c.bf16 %v512, %v512
      %v519 = vld [vmem:[%s2] sm:$0xff]
      %521 = vset.pattern.permute.xlu0 0
      %522 = vperm.xlu0 %521, %v519
      %v523 = vpop.permute.xlu0 %522
      %vm525 = vcmask 293888
      %v527 = vsel %vm525, %v502, 0
      %vm529 = vcmask 1041408
      %v531 = vsel %vm529, %v517, 0
      %v534 = vsel %vm529, %v518, 0
      %536 = vmatpush.bf16.msra.mxu0 0
      %537 = vmatpush.bf16.msra.mxu0 0
      %538 = vmatpush.bf16.msra.mxu0 0
      %539 = vmatpush.bf16.msra.mxu0 0
      %540 = vmatpush.bf16.msra.mxu0 0
      %541 = vmatpush.bf16.msra.mxu0 %v531
      %542 = vmatpush.bf16.msra.mxu0 %v515
      %543 = vmatpush.bf16.msra.mxu0 %v513
      %544 = vmatmul.bf16.gmra.mxu0 %v527
      %v545 = vpop.f32.mrf.mxu0
      %v546 = vadd.f32 %v523, %v545
      %v547 = vpop.f32.mrf.mxu0
      %548 = vdwg.mxu0
      %549 = vmatpush.bf16.msra.mxu0 0
      %550 = vmatpush.bf16.msra.mxu0 0
      %551 = vmatpush.bf16.msra.mxu0 0
      %552 = vmatpush.bf16.msra.mxu0 0
      %553 = vmatpush.bf16.msra.mxu0 0
      %554 = vmatpush.bf16.msra.mxu0 %v534
      %555 = vmatpush.bf16.msra.mxu0 %v516
      %556 = vmatpush.bf16.msra.mxu0 %v514
      %557 = vmatmul.bf16.gmra.mxu0 %v527
      %v558 = vpop.f32.mrf.mxu0
      %v559 = vadd.f32 %v523, %v558
      %v560 = vpop.f32.mrf.mxu0
      %561 = vdwg.mxu0
      %v562 = vadd.f32 %v546, %v559
      %563 = vadd.xlane.f32.xlu0 %v562
      %v564 = vpop.xlane.xlu0 %563
      %565 = vst.msk [vmem:[%s241] sm:$0xff] %vm373, %v564
      %v566 = vmul.f32 %v546, %v546
      %v567 = vmul.f32 %v559, %v559
      %v568 = vadd.f32 %v566, %v567
      %569 = vadd.xlane.f32.xlu0 %v568
      %v570 = vpop.xlane.xlu0 %569
      %571 = vst.msk [vmem:[%s245] sm:$0xff] %vm373, %v570
      %v572 = vpack.c.bf16 %v559, %v546
      %573 = vst [vmem:[%s237] sm:$0xff] %v572
      %p574 = scmp.lt.s32.totalorder %s17, 1
      %s575 = scalar_select %p574, %s17, 1
      %s576 = smul.addr %s575, 2
      %s577 = smul.addr %s576, 4
      %s578 = scalar_lea.vmem %s3, %s577
      %p579 = scmp.lt.s32.totalorder %s17, 1
      %s580 = scalar_select %p579, %s17, 1
      %s581 = smul.addr %s580, 8
      %s582 = scalar_lea.vmem %s4, %s581
      %p583 = scmp.lt.s32.totalorder %s17, 1
      %s584 = scalar_select %p583, %s17, 1
      %s585 = smul.addr %s584, 8
      %s586 = scalar_lea.vmem %s5, %s585
      // Predicated region
      $region33: #{double_conv.2} parent=31 // pred_check
        %p587 = pneg %p103
      $region34: #{double_conv.2} parent=31 // pred_check_branch
        %589 = sbr.rel (%p587) target = $region36
      $region35: #{double_conv.2} parent=31 // pred_region
        _
      $region36: #{double_conv.2} parent=31 // pred_fallthru
        _
      // Predicated region
      $region37: #{double_conv.2} parent=31 // pred_check
        %p590 = pneg %p129
      $region38: #{double_conv.2} parent=31 // pred_check_branch
        %592 = sbr.rel (%p590) target = $region40
      $region39: #{double_conv.2} parent=31 // pred_region
        _
      $region40: #{double_conv.2} parent=31 // pred_fallthru
        _
      // Predicated region
      $region41: #{double_conv.2} parent=31 // pred_check
        %p593 = pneg %p155
      $region42: #{double_conv.2} parent=31 // pred_check_branch
        %595 = sbr.rel (%p593) target = $region44
      $region43: #{double_conv.2} parent=31 // pred_region
        _
      $region44: #{double_conv.2} parent=31 // pred_fallthru
        _
    $region32: #{double_conv.2} parent=5 // pred_fallthru
      _
    %p596 = scmp.le.s32.totalorder 2, %s12
    // Predicated region
    $region45: #{double_conv.2} parent=5 // pred_check
      %p597 = pneg %p596
    $region46: #{double_conv.2} parent=5 // pred_check_branch
      %599 = sbr.rel (%p597) target = $region48
    $region47: #{double_conv.2} parent=5 // pred_region
      %s600 = ssub.s32 %s12, 2
      // Predicated region
      $region49: #{double_conv.2} parent=47 // pred_check
        %p601 = pneg %p109
      $region50: #{double_conv.2} parent=47 // pred_check_branch
        %603 = sbr.rel (%p601) target = $region52
      $region51: #{double_conv.2} parent=47 // pred_region
        %p604 = scmp.lt.s32.totalorder %s18, 1
        %s605 = scalar_select %p604, %s18, 1
        %s606 = smul.addr %s605, 2
        %s607 = smul.addr %s606, 4
        %s608 = scalar_lea.vmem %s3, %s607
      $region52: #{double_conv.2} parent=47 // pred_fallthru
        _
      // Predicated region
      $region53: #{double_conv.2} parent=47 // pred_check
        %p609 = pneg %p135
      $region54: #{double_conv.2} parent=47 // pred_check_branch
        %611 = sbr.rel (%p609) target = $region56
      $region55: #{double_conv.2} parent=47 // pred_region
        %p612 = scmp.lt.s32.totalorder %s18, 1
        %s613 = scalar_select %p612, %s18, 1
        %s614 = smul.addr %s613, 8
        %s615 = scalar_lea.vmem %s4, %s614
      $region56: #{double_conv.2} parent=47 // pred_fallthru
        _
      // Predicated region
      $region57: #{double_conv.2} parent=47 // pred_check
        %p616 = pneg %p161
      $region58: #{double_conv.2} parent=47 // pred_check_branch
        %618 = sbr.rel (%p616) target = $region60
      $region59: #{double_conv.2} parent=47 // pred_region
        %p619 = scmp.lt.s32.totalorder %s18, 1
        %s620 = scalar_select %p619, %s18, 1
        %s621 = smul.addr %s620, 8
        %s622 = scalar_lea.vmem %s5, %s621
      $region60: #{double_conv.2} parent=47 // pred_fallthru
        _
    $region48: #{double_conv.2} parent=5 // pred_fallthru
      _
  $region6: #{double_conv.2} parent=0 // loop_footer
    %s16 = sadd.s32 1, %s12
  $region7: #{double_conv.2} parent=0 // loop_footer_branch
    %11 = sbr.rel target = $region3
  $region8: #{double_conv.2} parent=0 // loop_exit
    _

</llo_original>
